<compile_context>
chip_gen: v6e
topology: v6e:2x2x1
jax: 0.10.0
libtpu: 0.0.40
codegen_flags: <defaults>
</compile_context>

<pallas_src>
import functools

import jax
import jax.numpy as jnp
from jax.experimental import pallas as pl
from jax.experimental.pallas import tpu as pltpu


def _finger_kernel(x_ref, w1_ref, w2_ref, b2_ref, w3_ref, out_ref, *, l1_on_mxu):
    # x block: (1, TILE_N, 4) f32 (xyz + ones column); out block: (1, 1, 1024) f32.
    x = x_ref[0]                                            # (TILE_N, 4)
    w1 = w1_ref[...]                                        # (4, 256), b1 folded in row 3

    if l1_on_mxu:
        # v6e/v7x: one tiny-K bf16 matmul on the MXU, frees the VPU epilogue.
        h = jnp.dot(x.astype(jnp.bfloat16), w1, preferred_element_type=jnp.float32)
    else:
        # v5e: MXU is the bound -> keep K=3 layer on the VPU (3 broadcast FMAs + bias).
        h = (x[:, 0:1] * w1[0:1, :]
             + x[:, 1:2] * w1[1:2, :]
             + x[:, 2:3] * w1[2:3, :]
             + w1[3:4, :])
    h = jnp.maximum(h, 0.0).astype(jnp.bfloat16)            # (TILE_N, 256)

    # Layers 2/3: bf16 MXU operands, f32 accumulation.
    h = jnp.dot(h, w2_ref[...], preferred_element_type=jnp.float32) + b2_ref[...]
    h = jnp.maximum(h, 0.0).astype(jnp.bfloat16)            # (TILE_N, 512)
    h = jnp.dot(h, w3_ref[...], preferred_element_type=jnp.float32)  # (TILE_N, 1024) raw

    # Layer-3 bias + ReLU are deferred to the wrapper (applied once on the reduced row).
    tile_max = jnp.max(h, axis=0, keepdims=True)            # (1, 1024)

    @pl.when(pl.program_id(1) == 0)
    def _():
        out_ref[0] = tile_max

    @pl.when(pl.program_id(1) > 0)
    def _():
        out_ref[0] = jnp.maximum(out_ref[0], tile_max)


def _round_up(x, m):
    return ((x + m - 1) // m) * m


def _cdiv(a, b):
    return -(-a // b)


@functools.partial(jax.jit, static_argnames=("tile_n", "l1_on_mxu"))
def _finger_feature_impl(xyz, params, tile_n, l1_on_mxu):
    """xyz: (B, N, 3) float32. Returns (B, 1024, 1) float32 (PyTorch global_feature)."""
    B, N, _ = xyz.shape
    w1, b1, w2, b2, w3, b3 = params

    # Fold b1 into w1 as a 4th row (paired with a ones column on x).
    w1b = jnp.concatenate([w1, b1], axis=0)                 # (4, 256)
    if l1_on_mxu:
        w1b = w1b.astype(jnp.bfloat16)
    # Big MXU weights cast once here.
    w2 = w2.astype(jnp.bfloat16)
    w3 = w3.astype(jnp.bfloat16)

    # P parallel partial-max partitions per batch element: gives 2 'parallel' grid
    # blocks when B == 1 so both TensorCores get work -- but only when each core
    # gets at least a full-ish tile (avoids duplicating the weight DMA for tiny N).
    P = 2 if (B == 1 and N >= 512) else 1

    n_per_part = _cdiv(N, P)
    tile_cap = max(8, min(_round_up(tile_n, 8), _round_up(n_per_part, 8)))
    chunks = _cdiv(n_per_part, tile_cap)                    # reduction-axis steps
    # Rebalance: spread rows evenly across chunks so the last chunk is not mostly padding.
    tile = _round_up(_cdiv(n_per_part, chunks), 8)
    n_pad = P * chunks * tile

    # Append the ones column (for the folded layer-1 bias), then pad with copies of
    # the first point -- duplicates never change the max.
    x4 = jnp.concatenate([xyz, jnp.ones((B, N, 1), xyz.dtype)], axis=2)   # (B, N, 4)
    if n_pad != N:
        pad = jnp.broadcast_to(x4[:, :1, :], (B, n_pad - N, 4))
        x4 = jnp.concatenate([x4, pad], axis=1)
    x = x4.reshape(B * P, n_pad // P, 4)

    kernel = functools.partial(_finger_kernel, l1_on_mxu=l1_on_mxu)

    grid_spec = pltpu.PrefetchScalarGridSpec(
        num_scalar_prefetch=0,
        grid=(B * P, chunks),
        in_specs=[
            pl.BlockSpec((1, tile, 4), lambda i, n: (i, n, 0)),
            pl.BlockSpec((4, 256), lambda i, n: (0, 0)),
            pl.BlockSpec((256, 512), lambda i, n: (0, 0)),
            pl.BlockSpec((1, 512), lambda i, n: (0, 0)),
            pl.BlockSpec((512, 1024), lambda i, n: (0, 0)),
        ],
        out_specs=pl.BlockSpec((1, 1, 1024), lambda i, n: (i, 0, 0)),
    )

    out = pl.pallas_call(
        kernel,
        out_shape=jax.ShapeDtypeStruct((B * P, 1, 1024), jnp.float32),
        grid_spec=grid_spec,
        compiler_params=pltpu.CompilerParams(
            dimension_semantics=("parallel", "arbitrary"),
        ),
    )(x, w1b, w2, b2, w3)

    # Combine the P partial maxes, then apply the deferred layer-3 bias + ReLU
    # exactly once on the reduced (B, 1024) row.
    g = out.reshape(B, P, 1024).max(axis=1)
    g = jnp.maximum(g + b3, 0.0)
    return g[:, :, None]                                    # (B, 1024, 1)


def _default_config():
    """Chip-aware defaults: (tile_n, l1_on_mxu)."""
    try:
        kind = jax.devices()[0].device_kind.lower()
    except Exception:
        kind = ""
    if "v5" in kind:
        # v5e: MXU-bound, 16 MiB scoped VMEM default -> smaller tile, layer 1 on VPU.
        return 512, False
    # v6e / v7x (and newer): VPU epilogue is co-binding, plenty of scoped VMEM at 1024.
    return 1024, True


def finger_feature_forward(xyz, params, tile_n=None, l1_on_mxu=None):
    assert xyz.ndim == 3 and xyz.shape[-1] == 3 and xyz.shape[1] >= 1, xyz.shape
    d_tile, d_mxu = _default_config()
    if tile_n is None:
        tile_n = d_tile
    if l1_on_mxu is None:
        l1_on_mxu = d_mxu
    return _finger_feature_impl(xyz, params, tile_n, l1_on_mxu)


def _fold_bn(w, b, gamma, beta, mean, var, eps=1e-5):
    """Fold an inference BatchNorm into a 1x1 conv. w: (Cin, Cout), b: (Cout,)."""
    scale = gamma / jnp.sqrt(var + eps)
    w_f = w * scale[None, :]
    b_f = (b - mean) * scale + beta
    return w_f.astype(jnp.float32), b_f.astype(jnp.float32)


def init_params(key):
    """Deterministic synthetic parameters for the mlp=[256, 512, 1024] SA block."""
    dims = [3, 256, 512, 1024]
    params = []
    keys = jax.random.split(key, 6)
    for i in range(3):
        cin, cout = dims[i], dims[i + 1]
        # Conv2d(cin, cout, 1) weight, stored transposed as (cin, cout).
        w = jax.random.normal(keys[2 * i], (cin, cout), jnp.float32) * (1.0 / jnp.sqrt(cin))
        b = jax.random.normal(keys[2 * i + 1], (cout,), jnp.float32) * 0.01
        # BatchNorm2d defaults: gamma=1, beta=0, running_mean=0, running_var=1.
        gamma = jnp.ones((cout,), jnp.float32)
        beta = jnp.zeros((cout,), jnp.float32)
        mean = jnp.zeros((cout,), jnp.float32)
        var = jnp.ones((cout,), jnp.float32)
        w_f, b_f = _fold_bn(w, b, gamma, beta, mean, var)
        params.extend([w_f, b_f.reshape(1, cout)])
    return tuple(params)


def reference_forward(xyz, params):
    """Pure-JAX f32 reference of the original module semantics."""
    w1, b1, w2, b2, w3, b3 = params
    h = jnp.maximum(xyz @ w1 + b1, 0.0)
    h = jnp.maximum(h @ w2 + b2, 0.0)
    h = jnp.maximum(h @ w3 + b3, 0.0)
    g = jnp.max(h, axis=1)                                  # (B, 1024)
    return g[:, :, None]                                    # (B, 1024, 1)


if __name__ == "__main__":
    key = jax.random.PRNGKey(0)
    k_param, k_x1, k_x2, k_x3 = jax.random.split(key, 4)

    params = init_params(k_param)

    # Case 1: canonical small shape (B=2, N=64) -> single grid step per batch.
    B, N = 2, 64
    xyz = jax.random.normal(k_x1, (B, N, 3), jnp.float32)
    out = jax.block_until_ready(finger_feature_forward(xyz, params))
    ref = reference_forward(xyz, params)
    assert out.shape == (B, 1024, 1), out.shape
    # bf16 MXU operands with f32 accumulation -> relaxed tolerance vs f32 reference.
    assert jnp.allclose(out, ref, atol=5e-2, rtol=5e-2), "mismatch vs reference (case 1)"

    # Case 2: B=1 with ragged small N (exercises padding rebalance, P stays 1).
    B2, N2 = 1, 50
    xyz2 = jax.random.normal(k_x2, (B2, N2, 3), jnp.float32)
    out2 = jax.block_until_ready(finger_feature_forward(xyz2, params))
    ref2 = reference_forward(xyz2, params)
    assert out2.shape == (B2, 1024, 1), out2.shape
    assert jnp.allclose(out2, ref2, atol=5e-2, rtol=5e-2), "mismatch vs reference (case 2)"

    # Case 3: B=1 with N large enough to trigger the 2-way megacore split.
    B3, N3 = 1, 600
    xyz3 = jax.random.normal(k_x3, (B3, N3, 3), jnp.float32)
    out3 = jax.block_until_ready(finger_feature_forward(xyz3, params))
    ref3 = reference_forward(xyz3, params)
    assert out3.shape == (B3, 1024, 1), out3.shape
    assert jnp.allclose(out3, ref3, atol=5e-2, rtol=5e-2), "mismatch vs reference (case 3)"

    print("KERNEL_OK")
</pallas_src>

<mosaic_0001>
module attributes {stable_mosaic.version = 11 : i64} {
  func.func @_finger_kernel(%arg0: i32, %arg1: i32, %arg2: memref<1x64x4xf32, #tpu.memory_space<vmem>>, %arg3: memref<4x256xbf16, #tpu.memory_space<vmem>>, %arg4: memref<256x512xbf16, #tpu.memory_space<vmem>>, %arg5: memref<1x512xf32, #tpu.memory_space<vmem>>, %arg6: memref<512x1024xbf16, #tpu.memory_space<vmem>>, %arg7: memref<1x1x1024xf32, #tpu.memory_space<vmem>>) attributes {dimension_semantics = [#tpu.dimension_semantics<parallel>, #tpu.dimension_semantics<arbitrary>], iteration_bounds = array<i64: 2, 1>, scalar_prefetch = 0 : i64, scratch_operands = 0 : i64, tpu.core_type = #tpu.core_type<tc>, window_params = [{transform_indices = @transform_0, window_bounds = array<i64: 1, 64, 4>}, {pipeline_mode = #tpu.pipeline_mode<synchronous>, transform_indices = @transform_1, window_bounds = array<i64: 4, 256>}, {pipeline_mode = #tpu.pipeline_mode<synchronous>, transform_indices = @transform_2, window_bounds = array<i64: 256, 512>}, {pipeline_mode = #tpu.pipeline_mode<synchronous>, transform_indices = @transform_3, window_bounds = array<i64: 1, 512>}, {pipeline_mode = #tpu.pipeline_mode<synchronous>, transform_indices = @transform_4, window_bounds = array<i64: 512, 1024>}, {transform_indices = @transform_5, window_bounds = array<i64: 1, 1, 1024>}]} {
    %c0 = arith.constant 0 : index
    %c0_0 = arith.constant 0 : index
    %c0_1 = arith.constant 0 : index
    %0 = vector.load %arg2[%c0, %c0_0, %c0_1] : memref<1x64x4xf32, #tpu.memory_space<vmem>>, vector<1x64x4xf32>
    %1 = vector.shape_cast %0 : vector<1x64x4xf32> to vector<64x4xf32>
    %c0_2 = arith.constant 0 : index
    %c0_3 = arith.constant 0 : index
    %2 = vector.load %arg3[%c0_2, %c0_3] : memref<4x256xbf16, #tpu.memory_space<vmem>>, vector<4x256xbf16>
    %3 = arith.truncf %1 : vector<64x4xf32> to vector<64x4xbf16>
    %cst = arith.constant dense<0.000000e+00> : vector<64x256xf32>
    %4 = tpu.matmul %3, %2, %cst {dimension_numbers = #tpu.dot_dimension_numbers<[1], [0], [0], [1], [0, 0, 1, 1], [], []>} : vector<64x4xbf16>, vector<4x256xbf16>, vector<64x256xf32> -> vector<64x256xf32>
    %cst_4 = arith.constant 0.000000e+00 : f32
    %5 = vector.broadcast %cst_4 : f32 to vector<64x256xf32>
    %6 = arith.maximumf %4, %5 : vector<64x256xf32>
    %7 = arith.truncf %6 : vector<64x256xf32> to vector<64x256xbf16>
    %c0_5 = arith.constant 0 : index
    %c0_6 = arith.constant 0 : index
    %8 = vector.load %arg4[%c0_5, %c0_6] : memref<256x512xbf16, #tpu.memory_space<vmem>>, vector<256x512xbf16>
    %cst_7 = arith.constant dense<0.000000e+00> : vector<64x512xf32>
    %9 = tpu.matmul %7, %8, %cst_7 {dimension_numbers = #tpu.dot_dimension_numbers<[1], [0], [0], [1], [0, 0, 1, 1], [], []>} : vector<64x256xbf16>, vector<256x512xbf16>, vector<64x512xf32> -> vector<64x512xf32>
    %c0_8 = arith.constant 0 : index
    %c0_9 = arith.constant 0 : index
    %10 = vector.load %arg5[%c0_8, %c0_9] : memref<1x512xf32, #tpu.memory_space<vmem>>, vector<1x512xf32>
    %11 = vector.broadcast %10 : vector<1x512xf32> to vector<64x512xf32>
    %12 = arith.addf %9, %11 : vector<64x512xf32>
    %cst_10 = arith.constant 0.000000e+00 : f32
    %13 = vector.broadcast %cst_10 : f32 to vector<64x512xf32>
    %14 = arith.maximumf %12, %13 : vector<64x512xf32>
    %15 = arith.truncf %14 : vector<64x512xf32> to vector<64x512xbf16>
    %c0_11 = arith.constant 0 : index
    %c0_12 = arith.constant 0 : index
    %16 = vector.load %arg6[%c0_11, %c0_12] : memref<512x1024xbf16, #tpu.memory_space<vmem>>, vector<512x1024xbf16>
    %cst_13 = arith.constant dense<0.000000e+00> : vector<64x1024xf32>
    %17 = tpu.matmul %15, %16, %cst_13 {dimension_numbers = #tpu.dot_dimension_numbers<[1], [0], [0], [1], [0, 0, 1, 1], [], []>} : vector<64x512xbf16>, vector<512x1024xbf16>, vector<64x1024xf32> -> vector<64x1024xf32>
    %cst_14 = arith.constant dense<0xFF800000> : vector<1024xf32>
    %18 = vector.multi_reduction <maximumf>, %17, %cst_14 [0] : vector<64x1024xf32> to vector<1024xf32>
    %19 = vector.shape_cast %18 : vector<1024xf32> to vector<1x1024xf32>
    %c0_i32 = arith.constant 0 : i32
    %20 = arith.cmpi eq, %arg1, %c0_i32 : i32
    %21 = arith.extui %20 : i1 to i32
    %c0_i32_15 = arith.constant 0 : i32
    %22 = arith.cmpi ne, %21, %c0_i32_15 : i32
    scf.if %22 {
      %c0_18 = arith.constant 0 : index
      %c0_19 = arith.constant 0 : index
      %c0_20 = arith.constant 0 : index
      %26 = vector.load %arg7[%c0_18, %c0_19, %c0_20] : memref<1x1x1024xf32, #tpu.memory_space<vmem>>, vector<1x1x1024xf32>
      %27 = vector.shape_cast %26 : vector<1x1x1024xf32> to vector<1x1024xf32>
      %28 = vector.shape_cast %19 : vector<1x1024xf32> to vector<1x1x1024xf32>
      tpu.vector_store %arg7[%c0_18, %c0_19, %c0_20], %28 {strides = array<i32>} : memref<1x1x1024xf32, #tpu.memory_space<vmem>>, vector<1x1x1024xf32>,
    } else {
    }
    %c0_i32_16 = arith.constant 0 : i32
    %23 = arith.cmpi sgt, %arg1, %c0_i32_16 : i32
    %24 = arith.extui %23 : i1 to i32
    %c0_i32_17 = arith.constant 0 : i32
    %25 = arith.cmpi ne, %24, %c0_i32_17 : i32
    scf.if %25 {
      %c0_18 = arith.constant 0 : index
      %c0_19 = arith.constant 0 : index
      %c0_20 = arith.constant 0 : index
      %26 = vector.load %arg7[%c0_18, %c0_19, %c0_20] : memref<1x1x1024xf32, #tpu.memory_space<vmem>>, vector<1x1x1024xf32>
      %27 = vector.shape_cast %26 : vector<1x1x1024xf32> to vector<1x1024xf32>
      %28 = arith.maximumf %27, %19 : vector<1x1024xf32>
      %c0_21 = arith.constant 0 : index
      %c0_22 = arith.constant 0 : index
      %c0_23 = arith.constant 0 : index
      %29 = vector.load %arg7[%c0_21, %c0_22, %c0_23] : memref<1x1x1024xf32, #tpu.memory_space<vmem>>, vector<1x1x1024xf32>
      %30 = vector.shape_cast %29 : vector<1x1x1024xf32> to vector<1x1024xf32>
      %31 = vector.shape_cast %28 : vector<1x1024xf32> to vector<1x1x1024xf32>
      tpu.vector_store %arg7[%c0_21, %c0_22, %c0_23], %31 {strides = array<i32>} : memref<1x1x1024xf32, #tpu.memory_space<vmem>>, vector<1x1x1024xf32>,
    } else {
    }
    return
  }
  func.func @transform_0(%arg0: i32, %arg1: i32) -> (i32, i32, i32) {
    %c0_i32 = arith.constant 0 : i32
    %c0_i32_0 = arith.constant 0 : i32
    return %arg0, %arg1, %c0_i32 : i32, i32, i32
  }
  func.func @transform_1(%arg0: i32, %arg1: i32) -> (i32, i32) {
    %c0_i32 = arith.constant 0 : i32
    %c0_i32_0 = arith.constant 0 : i32
    %c0_i32_1 = arith.constant 0 : i32
    return %c0_i32, %c0_i32_0 : i32, i32
  }
  func.func @transform_2(%arg0: i32, %arg1: i32) -> (i32, i32) {
    %c0_i32 = arith.constant 0 : i32
    %c0_i32_0 = arith.constant 0 : i32
    %c0_i32_1 = arith.constant 0 : i32
    return %c0_i32, %c0_i32_0 : i32, i32
  }
  func.func @transform_3(%arg0: i32, %arg1: i32) -> (i32, i32) {
    %c0_i32 = arith.constant 0 : i32
    %c0_i32_0 = arith.constant 0 : i32
    %c0_i32_1 = arith.constant 0 : i32
    return %c0_i32, %c0_i32_0 : i32, i32
  }
  func.func @transform_4(%arg0: i32, %arg1: i32) -> (i32, i32) {
    %c0_i32 = arith.constant 0 : i32
    %c0_i32_0 = arith.constant 0 : i32
    %c0_i32_1 = arith.constant 0 : i32
    return %c0_i32, %c0_i32_0 : i32, i32
  }
  func.func @transform_5(%arg0: i32, %arg1: i32) -> (i32, i32, i32) {
    %c0_i32 = arith.constant 0 : i32
    %c0_i32_0 = arith.constant 0 : i32
    %c0_i32_1 = arith.constant 0 : i32
    return %arg0, %c0_i32, %c0_i32_0 : i32, i32, i32
  }
}

</mosaic_0001>

<llo_original>
// kernel: _finger_feature_impl.1
$region0: #{_finger_feature_impl.1}
  #allocation0 [shape = 'u32[]', space=smem, size = 0x4, offset = 0x4, fixed_abs, tag = 'smem constant byte address 0x4 - core index']
  #allocation1 [shape = 'u32[144,128]{1,0:T(1,128)}', space=vmem, size = 0x12000, scoped, tag = 'internal scratch']
  %s0 = inlined_call_operand.vmem [shape: f32[2,64,4], index: 0, kind: input, shape index: {}]
  %s1 = inlined_call_operand.vmem [shape: bf16[4,256], index: 1, kind: input, shape index: {}]
  %s2 = inlined_call_operand.vmem [shape: bf16[256,512], index: 2, kind: input, shape index: {}]
  %s3 = inlined_call_operand.vmem [shape: f32[1,512], index: 3, kind: input, shape index: {}]
  %s4 = inlined_call_operand.vmem [shape: bf16[512,1024], index: 4, kind: input, shape index: {}]
  %s5 = inlined_call_operand.vmem [shape: f32[2,1,1024], index: 5, kind: output, shape index: {}]
  %s6 = sld [smem:[#allocation0]]
  $region61: #{_finger_feature_impl.1} parent=0
    _
  %s8 = ssub.s32 1, %s6
  %s9 = scalar_select 0, %s8, %s6
  loop: start=0, step=1, limit=4
  $region2: #{_finger_feature_impl.1} parent=0 // loop_pre_header
    _
  $region3: #{_finger_feature_impl.1} parent=0 // loop_header
    %s11 = sphi 0, %s15
    %p12 = scmp.ge.s32.totalorder %s11, 4
    %s18 = sphi 0, %s30
    %s19 = sphi 0, %s26
    %s20 = sphi 0, %s18
    %s21 = sphi 0, %s19
    %s22 = sphi 0, %s20
    %s23 = sphi 0, %s21
    %s35 = sphi 0, %s37
    %s38 = sphi 0, %s35
    %s39 = sphi 0, %s38
    %s55 = sphi 0, %s39
    %s59 = sphi 0, %s59
    %s61 = sphi 0, %s59
    %s62 = sphi 0, %s61
    %s76 = sphi 0, %s62
    %s80 = sphi 0, %s80
    %s82 = sphi 0, %s80
    %s83 = sphi 0, %s82
    %s97 = sphi 0, %s83
    %s101 = sphi 0, %s101
    %s103 = sphi 0, %s101
    %s104 = sphi 0, %s103
    %s118 = sphi 0, %s104
    %s122 = sphi 0, %s122
    %s124 = sphi 0, %s122
    %s125 = sphi 0, %s124
    %s139 = sphi 0, %s125
    %s145 = sphi 0, %s147
    %s148 = sphi 0, %s145
    %s149 = sphi 0, %s148
    %s165 = sphi 0, %s149
  $region4: #{_finger_feature_impl.1} parent=0 // loop_header_branch
    %14 = sbr.rel (%p12) target = $region8
  $region5: #{_finger_feature_impl.1} parent=0 // loop_body
    %s16 = ssub.s32 %s11, 1
    %s17 = ssub.s32 %s11, 2
    %s24 = sadd.s32 1, %s19
    %p25 = scmp.ge.s32.totalorder %s24, 1
    %s26 = scalar_select %p25, 0, %s24
    %s27 = sadd.s32 1, %s18
    %s28 = scalar_select %p25, %s27, %s18
    %p29 = scmp.ge.s32.totalorder %s28, 2
    %s30 = scalar_select %p29, 0, %s28
    %s31 = ssub.s32 %s18, %s30
    %s32 = ssub.s32 %s19, %s26
    %s33 = sor.u32 %s31, %s32
    %p34 = scmp.eq.s32.totalorder %s33, 0
    %s36 = sadd.s32 %s35, 1
    %s37 = scalar_select %p34, %s35, %s36
    %p40 = pneg %p34
    %p41 = scmp.eq.s32.totalorder %s11, 1
    %p42 = por %p40, %p41
    %p43 = scmp.ne.s32.totalorder %s35, %s38
    %p44 = scmp.eq.s32.totalorder %s11, 0
    %p45 = por %p43, %p44
    %p46 = scmp.ne.s32.totalorder %s35, %s38
    %p47 = scmp.eq.s32.totalorder %s16, 1
    %p48 = por %p46, %p47
    %p49 = scmp.ne.s32.totalorder %s38, %s39
    %p50 = scmp.eq.s32.totalorder %s16, 0
    %p51 = por %p49, %p50
    %p52 = scmp.ne.s32.totalorder %s38, %s39
    %p53 = scmp.eq.s32.totalorder %s17, 1
    %p54 = por %p52, %p53
    %p56 = scmp.ne.s32.totalorder %s39, %s55
    %p57 = scmp.eq.s32.totalorder %s17, 0
    %p58 = por %p56, %p57
    %s60 = sadd.s32 %s59, 1
    %p63 = scmp.eq.s32.totalorder %s11, 1
    %p64 = scmp.ne.s32.totalorder %s59, %s61
    %p65 = scmp.eq.s32.totalorder %s11, 0
    %p66 = por %p64, %p65
    %p67 = scmp.ne.s32.totalorder %s59, %s61
    %p68 = scmp.eq.s32.totalorder %s16, 1
    %p69 = por %p67, %p68
    %p70 = scmp.ne.s32.totalorder %s61, %s62
    %p71 = scmp.eq.s32.totalorder %s16, 0
    %p72 = por %p70, %p71
    %p73 = scmp.ne.s32.totalorder %s61, %s62
    %p74 = scmp.eq.s32.totalorder %s17, 1
    %p75 = por %p73, %p74
    %p77 = scmp.ne.s32.totalorder %s62, %s76
    %p78 = scmp.eq.s32.totalorder %s17, 0
    %p79 = por %p77, %p78
    %s81 = sadd.s32 %s80, 1
    %p84 = scmp.eq.s32.totalorder %s11, 1
    %p85 = scmp.ne.s32.totalorder %s80, %s82
    %p86 = scmp.eq.s32.totalorder %s11, 0
    %p87 = por %p85, %p86
    %p88 = scmp.ne.s32.totalorder %s80, %s82
    %p89 = scmp.eq.s32.totalorder %s16, 1
    %p90 = por %p88, %p89
    %p91 = scmp.ne.s32.totalorder %s82, %s83
    %p92 = scmp.eq.s32.totalorder %s16, 0
    %p93 = por %p91, %p92
    %p94 = scmp.ne.s32.totalorder %s82, %s83
    %p95 = scmp.eq.s32.totalorder %s17, 1
    %p96 = por %p94, %p95
    %p98 = scmp.ne.s32.totalorder %s83, %s97
    %p99 = scmp.eq.s32.totalorder %s17, 0
    %p100 = por %p98, %p99
    %s102 = sadd.s32 %s101, 1
    %p105 = scmp.eq.s32.totalorder %s11, 1
    %p106 = scmp.ne.s32.totalorder %s101, %s103
    %p107 = scmp.eq.s32.totalorder %s11, 0
    %p108 = por %p106, %p107
    %p109 = scmp.ne.s32.totalorder %s101, %s103
    %p110 = scmp.eq.s32.totalorder %s16, 1
    %p111 = por %p109, %p110
    %p112 = scmp.ne.s32.totalorder %s103, %s104
    %p113 = scmp.eq.s32.totalorder %s16, 0
    %p114 = por %p112, %p113
    %p115 = scmp.ne.s32.totalorder %s103, %s104
    %p116 = scmp.eq.s32.totalorder %s17, 1
    %p117 = por %p115, %p116
    %p119 = scmp.ne.s32.totalorder %s104, %s118
    %p120 = scmp.eq.s32.totalorder %s17, 0
    %p121 = por %p119, %p120
    %s123 = sadd.s32 %s122, 1
    %p126 = scmp.eq.s32.totalorder %s11, 1
    %p127 = scmp.ne.s32.totalorder %s122, %s124
    %p128 = scmp.eq.s32.totalorder %s11, 0
    %p129 = por %p127, %p128
    %p130 = scmp.ne.s32.totalorder %s122, %s124
    %p131 = scmp.eq.s32.totalorder %s16, 1
    %p132 = por %p130, %p131
    %p133 = scmp.ne.s32.totalorder %s124, %s125
    %p134 = scmp.eq.s32.totalorder %s16, 0
    %p135 = por %p133, %p134
    %p136 = scmp.ne.s32.totalorder %s124, %s125
    %p137 = scmp.eq.s32.totalorder %s17, 1
    %p138 = por %p136, %p137
    %p140 = scmp.ne.s32.totalorder %s125, %s139
    %p141 = scmp.eq.s32.totalorder %s17, 0
    %p142 = por %p140, %p141
    %s143 = ssub.s32 %s18, %s30
    %p144 = scmp.eq.s32.totalorder %s143, 0
    %s146 = sadd.s32 %s145, 1
    %s147 = scalar_select %p144, %s145, %s146
    %p150 = pneg %p144
    %p151 = scmp.eq.s32.totalorder %s11, 1
    %p152 = por %p150, %p151
    %p153 = scmp.ne.s32.totalorder %s145, %s148
    %p154 = scmp.eq.s32.totalorder %s11, 0
    %p155 = por %p153, %p154
    %p156 = scmp.ne.s32.totalorder %s145, %s148
    %p157 = scmp.eq.s32.totalorder %s16, 1
    %p158 = por %p156, %p157
    %p159 = scmp.ne.s32.totalorder %s148, %s149
    %p160 = scmp.eq.s32.totalorder %s16, 0
    %p161 = por %p159, %p160
    %p162 = scmp.ne.s32.totalorder %s148, %s149
    %p163 = scmp.eq.s32.totalorder %s17, 1
    %p164 = por %p162, %p163
    %p166 = scmp.ne.s32.totalorder %s149, %s165
    %p167 = scmp.eq.s32.totalorder %s17, 0
    %p168 = por %p166, %p167
    %p169 = scmp.le.s32.totalorder 1, %s11
    %p170 = scmp.lt.s32.totalorder %s11, 3
    %p171 = pnand %p169, %p170
    %p172 = pneg %p171
    // Predicated region
    $region9: #{_finger_feature_impl.1} parent=5 // pred_check
      _
    $region10: #{_finger_feature_impl.1} parent=5 // pred_check_branch
      %174 = sbr.rel (%p171) target = $region12
    $region11: #{_finger_feature_impl.1} parent=5 // pred_region
      %s175 = ssub.s32 %s11, 1
      // Predicated region
      $region13: #{_finger_feature_impl.1} parent=11 // pred_check
        %p176 = pneg %p72
      $region14: #{_finger_feature_impl.1} parent=11 // pred_check_branch
        %178 = sbr.rel (%p176) target = $region16
      $region15: #{_finger_feature_impl.1} parent=11 // pred_region
        _
      $region16: #{_finger_feature_impl.1} parent=11 // pred_fallthru
        _
      // Predicated region
      $region17: #{_finger_feature_impl.1} parent=11 // pred_check
        %p179 = pneg %p93
      $region18: #{_finger_feature_impl.1} parent=11 // pred_check_branch
        %181 = sbr.rel (%p179) target = $region20
      $region19: #{_finger_feature_impl.1} parent=11 // pred_region
        _
      $region20: #{_finger_feature_impl.1} parent=11 // pred_fallthru
        _
      // Predicated region
      $region21: #{_finger_feature_impl.1} parent=11 // pred_check
        %p182 = pneg %p114
      $region22: #{_finger_feature_impl.1} parent=11 // pred_check_branch
        %184 = sbr.rel (%p182) target = $region24
      $region23: #{_finger_feature_impl.1} parent=11 // pred_region
        _
      $region24: #{_finger_feature_impl.1} parent=11 // pred_fallthru
        _
      // Predicated region
      $region25: #{_finger_feature_impl.1} parent=11 // pred_check
        %p185 = pneg %p135
      $region26: #{_finger_feature_impl.1} parent=11 // pred_check_branch
        %187 = sbr.rel (%p185) target = $region28
      $region27: #{_finger_feature_impl.1} parent=11 // pred_region
        _
      $region28: #{_finger_feature_impl.1} parent=11 // pred_fallthru
        _
    $region12: #{_finger_feature_impl.1} parent=5 // pred_fallthru
      _
    %p188 = scmp.lt.s32.totalorder %s11, 2
    // Predicated region
    $region29: #{_finger_feature_impl.1} parent=5 // pred_check
      %p189 = pneg %p188
    $region30: #{_finger_feature_impl.1} parent=5 // pred_check_branch
      %191 = sbr.rel (%p189) target = $region32
    $region31: #{_finger_feature_impl.1} parent=5 // pred_region
      // Predicated region
      $region33: #{_finger_feature_impl.1} parent=31 // pred_check
        %p192 = pneg %p45
      $region34: #{_finger_feature_impl.1} parent=31 // pred_check_branch
        %194 = sbr.rel (%p192) target = $region36
      $region35: #{_finger_feature_impl.1} parent=31 // pred_region
        %s195 = smul.u32 8, %s19
        %p196 = scmp.lt.s32.totalorder %s18, 1
        %s197 = scalar_select %p196, %s18, 1
        %p198 = scmp.lt.s32.totalorder %s195, 7
        %s199 = scalar_select %p198, %s195, 7
        %s200 = smul.addr %s197, 8
        %s201 = sadd.s32 %s199, %s200
        %s202 = smul.addr %s201, 8
        %s203 = scalar_lea.vmem %s0, %s202
        %s204 = smul.u32 8, %s19
      $region36: #{_finger_feature_impl.1} parent=31 // pred_fallthru
        _
    $region32: #{_finger_feature_impl.1} parent=5 // pred_fallthru
      _
    %p205 = scmp.le.s32.totalorder 1, %s11
    %p206 = scmp.lt.s32.totalorder %s11, 3
    %p207 = pnand %p205, %p206
    %p208 = pneg %p207
    // Predicated region
    $region37: #{_finger_feature_impl.1} parent=5 // pred_check
      _
    $region38: #{_finger_feature_impl.1} parent=5 // pred_check_branch
      %210 = sbr.rel (%p207) target = $region40
    $region39: #{_finger_feature_impl.1} parent=5 // pred_region
      %s211 = ssub.s32 %s11, 1
      %s212 = smul.u32 8, %s21
      %p213 = scmp.lt.s32.totalorder %s20, 1
      %s214 = scalar_select %p213, %s20, 1
      %p215 = scmp.lt.s32.totalorder %s212, 7
      %s216 = scalar_select %p215, %s212, 7
      %s217 = smul.addr %s214, 8
      %s218 = sadd.s32 %s216, %s217
      %s219 = smul.addr %s218, 8
      %s220 = scalar_lea.vmem %s0, %s219
      %p221 = pneg %p51
      %p222 = pneg %p48
      %p223 = pneg %p72
      %p224 = pneg %p69
      %p225 = pneg %p93
      %p226 = pneg %p90
      %p227 = pneg %p114
      %p228 = pneg %p111
      %p229 = pneg %p135
      %p230 = pneg %p132
      %p231 = pneg %p161
      %p232 = pneg %p158
      %p233 = scmp.lt.s32.totalorder %s20, 1
      %s234 = scalar_select %p233, %s20, 1
      %s235 = smul.addr %s234, 8
      %s236 = scalar_lea.vmem %s5, %s235
      %s237 = smul.u32 8, %s21
      %p238 = scmp.lt.s32.totalorder %s20, 1
      %s239 = scalar_select %p238, %s20, 1
      %p240 = scmp.lt.s32.totalorder %s237, 7
      %s241 = scalar_select %p240, %s237, 7
      %s242 = smul.addr %s239, 8
      %s243 = sadd.s32 %s241, %s242
      %s244 = smul.addr %s243, 8
      %s245 = scalar_lea.vmem %s0, %s244
      %s246 = smul.u32 8, %s21
      %p247 = scmp.lt.s32.totalorder %s20, 1
      %s248 = scalar_select %p247, %s20, 1
      %s249 = smul.addr %s248, 8
      %s250 = scalar_lea.vmem %s5, %s249
      %v252 = vld [vmem:[%s245] sm:$0xff]
      %v253 = vld [vmem:[%s245 + $0x8] sm:$0xff]
      %v254 = vld [vmem:[%s245 + $0x10] sm:$0xff]
      %v255 = vld [vmem:[%s245 + $0x18] sm:$0xff]
      %v256 = vld [vmem:[%s245 + $0x20] sm:$0xff]
      %v257 = vld [vmem:[%s245 + $0x28] sm:$0xff]
      %v258 = vld [vmem:[%s245 + $0x30] sm:$0xff]
      %v259 = vld [vmem:[%s245 + $0x38] sm:$0xff]
      %v260 = vld [vmem:[%s1] sm:$0xf]
      %v261 = vpack.c.bf16 %v253, %v252
      %v262 = vpack.c.bf16 %v255, %v254
      %v263 = vpack.c.bf16 %v257, %v256
      %v264 = vpack.c.bf16 %v259, %v258
      %v267 = vunpack.c.l.s4 1983009808
      %v268 = vunpack.c.0.s8 %v267
      %v269 = vlaneseq
      %v270 = vshrl.u32 %v269, 7
      %v271 = vsub.s32 %v268, %v270
      %v272 = vrot.slane %v260, %v271
      %v273 = vcombine.high %v272, %v272
      %vm274 = vcmask 31744
      %v276 = vsel %vm274, %v261, 0
      %v279 = vsel %vm274, %v262, 0
      %v282 = vsel %vm274, %v263, 0
      %v285 = vsel %vm274, %v264, 0
      %vm287 = vcmask 1041408
      %v289 = vsel %vm287, %v272, 0
      %v292 = vsel %vm287, %v273, 0
      %294 = vmatprep.subr.bf16.mxu0 0
      %295 = vmatpush1.bf16.msra.mxu0 0
      %296 = vmatprep.subr.bf16.mxu0 0
      %297 = vmatpush1.bf16.msra.mxu0 0
      %298 = vmatprep.subr.bf16.mxu0 0
      %299 = vmatpush1.bf16.msra.mxu0 0
      %300 = vmatprep.subr.bf16.mxu0 0
      %301 = vmatpush1.bf16.msra.mxu0 0
      %302 = vmatprep.subr.bf16.mxu0 0
      %303 = vmatpush1.bf16.msra.mxu0 0
      %304 = vmatprep.subr.bf16.mxu0 0
      %305 = vmatpush1.bf16.msra.mxu0 0
      %306 = vmatprep.subr.bf16.mxu0 0
      %307 = vmatpush1.bf16.msra.mxu0 0
      %308 = vmatprep.subr.bf16.mxu0 %v292
      %309 = vmatpush1.bf16.msra.mxu0 %v289
      %310 = vmatprep.subr.bf16.mxu0 0
      %311 = vmatpush2.bf16.msra.mxu0 0
      %312 = vmatprep.subr.bf16.mxu0 0
      %313 = vmatpush2.bf16.msra.mxu0 0
      %314 = vmatprep.subr.bf16.mxu0 0
      %315 = vmatpush2.bf16.msra.mxu0 0
      %316 = vmatprep.subr.bf16.mxu0 0
      %317 = vmatpush2.bf16.msra.mxu0 0
      %318 = vmatprep.subr.bf16.mxu0 0
      %319 = vmatpush2.bf16.msra.mxu0 0
      %320 = vmatprep.subr.bf16.mxu0 0
      %321 = vmatpush2.bf16.msra.mxu0 0
      %322 = vmatprep.subr.bf16.mxu0 0
      %323 = vmatpush2.bf16.msra.mxu0 0
      %324 = vmatprep.subr.bf16.mxu0 0
      %325 = vmatpush2.bf16.msra.mxu0 0
      %326 = vmatprep.mubr.bf16.mxu0 0
      %327 = vmatmul.mubr.bf16.gmra.mxu0 %v276
      %v328 = vpop.f32.mrf.mxu0
      %v329 = vadd.f32 0.0, %v328
      %v330 = vpop.f32.mrf.mxu0
      %v331 = vadd.f32 0.0, %v330
      %v332 = vpop.f32.mrf.mxu0
      %v333 = vadd.f32 0.0, %v332
      %v334 = vpop.f32.mrf.mxu0
      %v335 = vadd.f32 0.0, %v334
      %336 = vmatprep.mubr.bf16.mxu0 0
      %337 = vmatmul.mubr.bf16.gmra.mxu0 %v279
      %v338 = vpop.f32.mrf.mxu0
      %v339 = vadd.f32 0.0, %v338
      %v340 = vpop.f32.mrf.mxu0
      %v341 = vadd.f32 0.0, %v340
      %v342 = vpop.f32.mrf.mxu0
      %v343 = vadd.f32 0.0, %v342
      %v344 = vpop.f32.mrf.mxu0
      %v345 = vadd.f32 0.0, %v344
      %346 = vmatprep.mubr.bf16.mxu0 0
      %347 = vmatmul.mubr.bf16.gmra.mxu0 %v282
      %v348 = vpop.f32.mrf.mxu0
      %v349 = vadd.f32 0.0, %v348
      %v350 = vpop.f32.mrf.mxu0
      %v351 = vadd.f32 0.0, %v350
      %v352 = vpop.f32.mrf.mxu0
      %v353 = vadd.f32 0.0, %v352
      %v354 = vpop.f32.mrf.mxu0
      %v355 = vadd.f32 0.0, %v354
      %356 = vmatprep.mubr.bf16.mxu0 0
      %357 = vmatmul.mubr.bf16.gmra.mxu0 %v285
      %v358 = vpop.f32.mrf.mxu0
      %v359 = vadd.f32 0.0, %v358
      %v360 = vpop.f32.mrf.mxu0
      %v361 = vadd.f32 0.0, %v360
      %v362 = vpop.f32.mrf.mxu0
      %v363 = vadd.f32 0.0, %v362
      %v364 = vpop.f32.mrf.mxu0
      %v365 = vadd.f32 0.0, %v364
      %366 = vdwg.mxu0
      %v367 = vmax.f32 %v329, 0.0
      %v368 = vmax.f32 %v331, 0.0
      %v369 = vmax.f32 %v333, 0.0
      %v370 = vmax.f32 %v335, 0.0
      %v371 = vmax.f32 %v339, 0.0
      %v372 = vmax.f32 %v341, 0.0
      %v373 = vmax.f32 %v343, 0.0
      %v374 = vmax.f32 %v345, 0.0
      %v375 = vmax.f32 %v349, 0.0
      %v376 = vmax.f32 %v351, 0.0
      %v377 = vmax.f32 %v353, 0.0
      %v378 = vmax.f32 %v355, 0.0
      %v379 = vmax.f32 %v359, 0.0
      %v380 = vmax.f32 %v361, 0.0
      %v381 = vmax.f32 %v363, 0.0
      %v382 = vmax.f32 %v365, 0.0
      %v383 = vpack.c.bf16 %v369, %v367
      %v384 = vpack.c.bf16 %v370, %v368
      %v385 = vpack.c.bf16 %v373, %v371
      %v386 = vpack.c.bf16 %v374, %v372
      %v387 = vpack.c.bf16 %v377, %v375
      %v388 = vpack.c.bf16 %v378, %v376
      %v389 = vpack.c.bf16 %v381, %v379
      %v390 = vpack.c.bf16 %v382, %v380
      %v391 = vld [vmem:[%s2] sm:$0xff]
      %v392 = vld [vmem:[%s2 + $0x8] sm:$0xff]
      %v393 = vld [vmem:[%s2 + $0x10] sm:$0xff]
      %v394 = vld [vmem:[%s2 + $0x18] sm:$0xff]
      %v395 = vld [vmem:[%s2 + $0x20] sm:$0xff]
      %v396 = vld [vmem:[%s2 + $0x28] sm:$0xff]
      %v397 = vld [vmem:[%s2 + $0x30] sm:$0xff]
      %v398 = vld [vmem:[%s2 + $0x38] sm:$0xff]
      %v399 = vld [vmem:[%s2 + $0x40] sm:$0xff]
      %v400 = vld [vmem:[%s2 + $0x48] sm:$0xff]
      %v401 = vld [vmem:[%s2 + $0x50] sm:$0xff]
      %v402 = vld [vmem:[%s2 + $0x58] sm:$0xff]
      %v403 = vld [vmem:[%s2 + $0x60] sm:$0xff]
      %v404 = vld [vmem:[%s2 + $0x68] sm:$0xff]
      %v405 = vld [vmem:[%s2 + $0x70] sm:$0xff]
      %v406 = vld [vmem:[%s2 + $0x78] sm:$0xff]
      %v407 = vld [vmem:[%s2 + $0x80] sm:$0xff]
      %v408 = vld [vmem:[%s2 + $0x88] sm:$0xff]
      %v409 = vld [vmem:[%s2 + $0x90] sm:$0xff]
      %v410 = vld [vmem:[%s2 + $0x98] sm:$0xff]
      %v411 = vld [vmem:[%s2 + $0xa0] sm:$0xff]
      %v412 = vld [vmem:[%s2 + $0xa8] sm:$0xff]
      %v413 = vld [vmem:[%s2 + $0xb0] sm:$0xff]
      %v414 = vld [vmem:[%s2 + $0xb8] sm:$0xff]
      %v415 = vld [vmem:[%s2 + $0xc0] sm:$0xff]
      %v416 = vld [vmem:[%s2 + $0xc8] sm:$0xff]
      %v417 = vld [vmem:[%s2 + $0xd0] sm:$0xff]
      %v418 = vld [vmem:[%s2 + $0xd8] sm:$0xff]
      %v419 = vld [vmem:[%s2 + $0xe0] sm:$0xff]
      %v420 = vld [vmem:[%s2 + $0xe8] sm:$0xff]
      %v421 = vld [vmem:[%s2 + $0xf0] sm:$0xff]
      %v422 = vld [vmem:[%s2 + $0xf8] sm:$0xff]
      %v423 = vld [vmem:[%s2 + $0x100] sm:$0xff]
      %v424 = vld [vmem:[%s2 + $0x108] sm:$0xff]
      %v425 = vld [vmem:[%s2 + $0x110] sm:$0xff]
      %v426 = vld [vmem:[%s2 + $0x118] sm:$0xff]
      %v427 = vld [vmem:[%s2 + $0x120] sm:$0xff]
      %v428 = vld [vmem:[%s2 + $0x128] sm:$0xff]
      %v429 = vld [vmem:[%s2 + $0x130] sm:$0xff]
      %v430 = vld [vmem:[%s2 + $0x138] sm:$0xff]
      %v431 = vld [vmem:[%s2 + $0x140] sm:$0xff]
      %v432 = vld [vmem:[%s2 + $0x148] sm:$0xff]
      %v433 = vld [vmem:[%s2 + $0x150] sm:$0xff]
      %v434 = vld [vmem:[%s2 + $0x158] sm:$0xff]
      %v435 = vld [vmem:[%s2 + $0x160] sm:$0xff]
      %v436 = vld [vmem:[%s2 + $0x168] sm:$0xff]
      %v437 = vld [vmem:[%s2 + $0x170] sm:$0xff]
      %v438 = vld [vmem:[%s2 + $0x178] sm:$0xff]
      %v439 = vld [vmem:[%s2 + $0x180] sm:$0xff]
      %v440 = vld [vmem:[%s2 + $0x188] sm:$0xff]
      %v441 = vld [vmem:[%s2 + $0x190] sm:$0xff]
      %v442 = vld [vmem:[%s2 + $0x198] sm:$0xff]
      %v443 = vld [vmem:[%s2 + $0x1a0] sm:$0xff]
      %v444 = vld [vmem:[%s2 + $0x1a8] sm:$0xff]
      %v445 = vld [vmem:[%s2 + $0x1b0] sm:$0xff]
      %v446 = vld [vmem:[%s2 + $0x1b8] sm:$0xff]
      %v447 = vld [vmem:[%s2 + $0x1c0] sm:$0xff]
      %v448 = vld [vmem:[%s2 + $0x1c8] sm:$0xff]
      %v449 = vld [vmem:[%s2 + $0x1d0] sm:$0xff]
      %v450 = vld [vmem:[%s2 + $0x1d8] sm:$0xff]
      %v451 = vld [vmem:[%s2 + $0x1e0] sm:$0xff]
      %v452 = vld [vmem:[%s2 + $0x1e8] sm:$0xff]
      %v453 = vld [vmem:[%s2 + $0x1f0] sm:$0xff]
      %v454 = vld [vmem:[%s2 + $0x1f8] sm:$0xff]
      %v455 = vld [vmem:[%s3] sm:$0xf]
      %v457 = vlaneseq
      %v458 = vshrl.u32 %v457, 7
      %v459 = vsub.s32 0, %v458
      %v460 = vrot.slane %v455, %v459
      %v461 = vlaneseq
      %v462 = vshrl.u32 %v461, 7
      %v463 = vsub.s32 1, %v462
      %v464 = vrot.slane %v455, %v463
      %v465 = vlaneseq
      %v466 = vshrl.u32 %v465, 7
      %v467 = vsub.s32 2, %v466
      %v468 = vrot.slane %v455, %v467
      %v469 = vlaneseq
      %v470 = vshrl.u32 %v469, 7
      %v471 = vsub.s32 3, %v470
      %v472 = vrot.slane %v455, %v471
      %v541 = vunpack.c.l.b16 %v391
      %v542 = vunpack.c.h.b16 %v391
      %v543 = vunpack.c.l.b16 %v392
      %v544 = vunpack.c.h.b16 %v392
      %v545 = vunpack.c.l.b16 %v393
      %v546 = vunpack.c.h.b16 %v393
      %v547 = vunpack.c.l.b16 %v394
      %v548 = vunpack.c.h.b16 %v394
      %v549 = vunpack.c.l.b16 %v395
      %v550 = vunpack.c.h.b16 %v395
      %v551 = vunpack.c.l.b16 %v396
      %v552 = vunpack.c.h.b16 %v396
      %v553 = vunpack.c.l.b16 %v397
      %v554 = vunpack.c.h.b16 %v397
      %v555 = vunpack.c.l.b16 %v398
      %v556 = vunpack.c.h.b16 %v398
      %v557 = vunpack.c.l.b16 %v399
      %v558 = vunpack.c.h.b16 %v399
      %v559 = vunpack.c.l.b16 %v400
      %v560 = vunpack.c.h.b16 %v400
      %v561 = vunpack.c.l.b16 %v401
      %v562 = vunpack.c.h.b16 %v401
      %v563 = vunpack.c.l.b16 %v402
      %v564 = vunpack.c.h.b16 %v402
      %v565 = vunpack.c.l.b16 %v403
      %v566 = vunpack.c.h.b16 %v403
      %v567 = vunpack.c.l.b16 %v404
      %v568 = vunpack.c.h.b16 %v404
      %v569 = vunpack.c.l.b16 %v405
      %v570 = vunpack.c.h.b16 %v405
      %v571 = vunpack.c.l.b16 %v406
      %v572 = vunpack.c.h.b16 %v406
      %v573 = vunpack.c.l.b16 %v407
      %v574 = vunpack.c.h.b16 %v407
      %v575 = vunpack.c.l.b16 %v408
      %v576 = vunpack.c.h.b16 %v408
      %v577 = vunpack.c.l.b16 %v409
      %v578 = vunpack.c.h.b16 %v409
      %v579 = vunpack.c.l.b16 %v410
      %v580 = vunpack.c.h.b16 %v410
      %v581 = vunpack.c.l.b16 %v411
      %v582 = vunpack.c.h.b16 %v411
      %v583 = vunpack.c.l.b16 %v412
      %v584 = vunpack.c.h.b16 %v412
      %v585 = vunpack.c.l.b16 %v413
      %v586 = vunpack.c.h.b16 %v413
      %v587 = vunpack.c.l.b16 %v414
      %v588 = vunpack.c.h.b16 %v414
      %v589 = vunpack.c.l.b16 %v415
      %v590 = vunpack.c.h.b16 %v415
      %v591 = vunpack.c.l.b16 %v416
      %v592 = vunpack.c.h.b16 %v416
      %v593 = vunpack.c.l.b16 %v417
      %v594 = vunpack.c.h.b16 %v417
      %v595 = vunpack.c.l.b16 %v418
      %v596 = vunpack.c.h.b16 %v418
      %v597 = vunpack.c.l.b16 %v419
      %v598 = vunpack.c.h.b16 %v419
      %v599 = vunpack.c.l.b16 %v420
      %v600 = vunpack.c.h.b16 %v420
      %v601 = vunpack.c.l.b16 %v421
      %v602 = vunpack.c.h.b16 %v421
      %v603 = vunpack.c.l.b16 %v422
      %v604 = vunpack.c.h.b16 %v422
      %v605 = vunpack.c.l.b16 %v423
      %v606 = vunpack.c.h.b16 %v423
      %v607 = vunpack.c.l.b16 %v424
      %v608 = vunpack.c.h.b16 %v424
      %v609 = vunpack.c.l.b16 %v425
      %v610 = vunpack.c.h.b16 %v425
      %v611 = vunpack.c.l.b16 %v426
      %v612 = vunpack.c.h.b16 %v426
      %v613 = vunpack.c.l.b16 %v427
      %v614 = vunpack.c.h.b16 %v427
      %v615 = vunpack.c.l.b16 %v428
      %v616 = vunpack.c.h.b16 %v428
      %v617 = vunpack.c.l.b16 %v429
      %v618 = vunpack.c.h.b16 %v429
      %v619 = vunpack.c.l.b16 %v430
      %v620 = vunpack.c.h.b16 %v430
      %v621 = vunpack.c.l.b16 %v431
      %v622 = vunpack.c.h.b16 %v431
      %v623 = vunpack.c.l.b16 %v432
      %v624 = vunpack.c.h.b16 %v432
      %v625 = vunpack.c.l.b16 %v433
      %v626 = vunpack.c.h.b16 %v433
      %v627 = vunpack.c.l.b16 %v434
      %v628 = vunpack.c.h.b16 %v434
      %v629 = vunpack.c.l.b16 %v435
      %v630 = vunpack.c.h.b16 %v435
      %v631 = vunpack.c.l.b16 %v436
      %v632 = vunpack.c.h.b16 %v436
      %v633 = vunpack.c.l.b16 %v437
      %v634 = vunpack.c.h.b16 %v437
      %v635 = vunpack.c.l.b16 %v438
      %v636 = vunpack.c.h.b16 %v438
      %v637 = vunpack.c.l.b16 %v439
      %v638 = vunpack.c.h.b16 %v439
      %v639 = vunpack.c.l.b16 %v440
      %v640 = vunpack.c.h.b16 %v440
      %v641 = vunpack.c.l.b16 %v441
      %v642 = vunpack.c.h.b16 %v441
      %v643 = vunpack.c.l.b16 %v442
      %v644 = vunpack.c.h.b16 %v442
      %v645 = vunpack.c.l.b16 %v443
      %v646 = vunpack.c.h.b16 %v443
      %v647 = vunpack.c.l.b16 %v444
      %v648 = vunpack.c.h.b16 %v444
      %v649 = vunpack.c.l.b16 %v445
      %v650 = vunpack.c.h.b16 %v445
      %v651 = vunpack.c.l.b16 %v446
      %v652 = vunpack.c.h.b16 %v446
      %v653 = vunpack.c.l.b16 %v447
      %v654 = vunpack.c.h.b16 %v447
      %v655 = vunpack.c.l.b16 %v448
      %v656 = vunpack.c.h.b16 %v448
      %v657 = vunpack.c.l.b16 %v449
      %v658 = vunpack.c.h.b16 %v449
      %v659 = vunpack.c.l.b16 %v450
      %v660 = vunpack.c.h.b16 %v450
      %v661 = vunpack.c.l.b16 %v451
      %v662 = vunpack.c.h.b16 %v451
      %v663 = vunpack.c.l.b16 %v452
      %v664 = vunpack.c.h.b16 %v452
      %v665 = vunpack.c.l.b16 %v453
      %v666 = vunpack.c.h.b16 %v453
      %v667 = vunpack.c.l.b16 %v454
      %v668 = vunpack.c.h.b16 %v454
      %v669 = vpack.c.b16 %v545, %v541
      %v670 = vpack.c.b16 %v546, %v542
      %v671 = vpack.c.b16 %v547, %v543
      %v672 = vpack.c.b16 %v548, %v544
      %v673 = vpack.c.b16 %v553, %v549
      %v674 = vpack.c.b16 %v554, %v550
      %v675 = vpack.c.b16 %v555, %v551
      %v676 = vpack.c.b16 %v556, %v552
      %v677 = vpack.c.b16 %v561, %v557
      %v678 = vpack.c.b16 %v562, %v558
      %v679 = vpack.c.b16 %v563, %v559
      %v680 = vpack.c.b16 %v564, %v560
      %v681 = vpack.c.b16 %v569, %v565
      %v682 = vpack.c.b16 %v570, %v566
      %v683 = vpack.c.b16 %v571, %v567
      %v684 = vpack.c.b16 %v572, %v568
      %v685 = vpack.c.b16 %v577, %v573
      %v686 = vpack.c.b16 %v578, %v574
      %v687 = vpack.c.b16 %v579, %v575
      %v688 = vpack.c.b16 %v580, %v576
      %v689 = vpack.c.b16 %v585, %v581
      %v690 = vpack.c.b16 %v586, %v582
      %v691 = vpack.c.b16 %v587, %v583
      %v692 = vpack.c.b16 %v588, %v584
      %v693 = vpack.c.b16 %v593, %v589
      %v694 = vpack.c.b16 %v594, %v590
      %v695 = vpack.c.b16 %v595, %v591
      %v696 = vpack.c.b16 %v596, %v592
      %v697 = vpack.c.b16 %v601, %v597
      %v698 = vpack.c.b16 %v602, %v598
      %v699 = vpack.c.b16 %v603, %v599
      %v700 = vpack.c.b16 %v604, %v600
      %v701 = vpack.c.b16 %v609, %v605
      %v702 = vpack.c.b16 %v610, %v606
      %v703 = vpack.c.b16 %v611, %v607
      %v704 = vpack.c.b16 %v612, %v608
      %v705 = vpack.c.b16 %v617, %v613
      %v706 = vpack.c.b16 %v618, %v614
      %v707 = vpack.c.b16 %v619, %v615
      %v708 = vpack.c.b16 %v620, %v616
      %v709 = vpack.c.b16 %v625, %v621
      %v710 = vpack.c.b16 %v626, %v622
      %v711 = vpack.c.b16 %v627, %v623
      %v712 = vpack.c.b16 %v628, %v624
      %v713 = vpack.c.b16 %v633, %v629
      %v714 = vpack.c.b16 %v634, %v630
      %v715 = vpack.c.b16 %v635, %v631
      %v716 = vpack.c.b16 %v636, %v632
      %v717 = vpack.c.b16 %v641, %v637
      %v718 = vpack.c.b16 %v642, %v638
      %v719 = vpack.c.b16 %v643, %v639
      %v720 = vpack.c.b16 %v644, %v640
      %v721 = vpack.c.b16 %v649, %v645
      %v722 = vpack.c.b16 %v650, %v646
      %v723 = vpack.c.b16 %v651, %v647
      %v724 = vpack.c.b16 %v652, %v648
      %v725 = vpack.c.b16 %v657, %v653
      %v726 = vpack.c.b16 %v658, %v654
      %v727 = vpack.c.b16 %v659, %v655
      %v728 = vpack.c.b16 %v660, %v656
      %v729 = vpack.c.b16 %v665, %v661
      %v730 = vpack.c.b16 %v666, %v662
      %v731 = vpack.c.b16 %v667, %v663
      %v732 = vpack.c.b16 %v668, %v664
      %797 = vmatprep.subr.bf16.mxu0 %v698
      %798 = vmatpush1.bf16.msra.mxu0 %v697
      %799 = vmatprep.subr.bf16.mxu0 %v694
      %800 = vmatpush1.bf16.msra.mxu0 %v693
      %801 = vmatprep.subr.bf16.mxu0 %v690
      %802 = vmatpush1.bf16.msra.mxu0 %v689
      %803 = vmatprep.subr.bf16.mxu0 %v686
      %804 = vmatpush1.bf16.msra.mxu0 %v685
      %805 = vmatprep.subr.bf16.mxu0 %v682
      %806 = vmatpush1.bf16.msra.mxu0 %v681
      %807 = vmatprep.subr.bf16.mxu0 %v678
      %808 = vmatpush1.bf16.msra.mxu0 %v677
      %809 = vmatprep.subr.bf16.mxu0 %v674
      %810 = vmatpush1.bf16.msra.mxu0 %v673
      %811 = vmatprep.subr.bf16.mxu0 %v670
      %812 = vmatpush1.bf16.msra.mxu0 %v669
      %813 = vmatprep.subr.bf16.mxu0 %v730
      %814 = vmatpush2.bf16.msra.mxu0 %v729
      %815 = vmatprep.subr.bf16.mxu0 %v726
      %816 = vmatpush2.bf16.msra.mxu0 %v725
      %817 = vmatprep.subr.bf16.mxu0 %v722
      %818 = vmatpush2.bf16.msra.mxu0 %v721
      %819 = vmatprep.subr.bf16.mxu0 %v718
      %820 = vmatpush2.bf16.msra.mxu0 %v717
      %821 = vmatprep.subr.bf16.mxu0 %v714
      %822 = vmatpush2.bf16.msra.mxu0 %v713
      %823 = vmatprep.subr.bf16.mxu0 %v710
      %824 = vmatpush2.bf16.msra.mxu0 %v709
      %825 = vmatprep.subr.bf16.mxu0 %v706
      %826 = vmatpush2.bf16.msra.mxu0 %v705
      %827 = vmatprep.subr.bf16.mxu0 %v702
      %828 = vmatpush2.bf16.msra.mxu0 %v701
      %829 = vmatprep.mubr.bf16.mxu0 %v384
      %830 = vmatmul.mubr.bf16.gmra.mxu0 %v383
      %v831 = vpop.f32.mrf.mxu0
      %v832 = vadd.f32 %v460, %v831
      %v833 = vpop.f32.mrf.mxu0
      %v834 = vadd.f32 %v464, %v833
      %v835 = vpop.f32.mrf.mxu0
      %v836 = vadd.f32 %v460, %v835
      %v837 = vpop.f32.mrf.mxu0
      %v838 = vadd.f32 %v464, %v837
      %839 = vmatprep.mubr.bf16.mxu0 %v386
      %840 = vmatmul.mubr.bf16.gmra.mxu0 %v385
      %v841 = vpop.f32.mrf.mxu0
      %v842 = vadd.f32 %v460, %v841
      %v843 = vpop.f32.mrf.mxu0
      %v844 = vadd.f32 %v464, %v843
      %v845 = vpop.f32.mrf.mxu0
      %v846 = vadd.f32 %v460, %v845
      %v847 = vpop.f32.mrf.mxu0
      %v848 = vadd.f32 %v464, %v847
      %849 = vmatprep.mubr.bf16.mxu0 %v388
      %850 = vmatmul.mubr.bf16.gmra.mxu0 %v387
      %v851 = vpop.f32.mrf.mxu0
      %v852 = vadd.f32 %v460, %v851
      %v853 = vpop.f32.mrf.mxu0
      %v854 = vadd.f32 %v464, %v853
      %v855 = vpop.f32.mrf.mxu0
      %v856 = vadd.f32 %v460, %v855
      %v857 = vpop.f32.mrf.mxu0
      %v858 = vadd.f32 %v464, %v857
      %859 = vmatprep.mubr.bf16.mxu0 %v390
      %860 = vmatmul.mubr.bf16.gmra.mxu0 %v389
      %v861 = vpop.f32.mrf.mxu0
      %v862 = vadd.f32 %v460, %v861
      %v863 = vpop.f32.mrf.mxu0
      %v864 = vadd.f32 %v464, %v863
      %v865 = vpop.f32.mrf.mxu0
      %v866 = vadd.f32 %v460, %v865
      %v867 = vpop.f32.mrf.mxu0
      %v868 = vadd.f32 %v464, %v867
      %869 = vdwg.mxu0
      %870 = vmatprep.subr.bf16.mxu0 %v700
      %871 = vmatpush1.bf16.msra.mxu0 %v699
      %872 = vmatprep.subr.bf16.mxu0 %v696
      %873 = vmatpush1.bf16.msra.mxu0 %v695
      %874 = vmatprep.subr.bf16.mxu0 %v692
      %875 = vmatpush1.bf16.msra.mxu0 %v691
      %876 = vmatprep.subr.bf16.mxu0 %v688
      %877 = vmatpush1.bf16.msra.mxu0 %v687
      %878 = vmatprep.subr.bf16.mxu0 %v684
      %879 = vmatpush1.bf16.msra.mxu0 %v683
      %880 = vmatprep.subr.bf16.mxu0 %v680
      %881 = vmatpush1.bf16.msra.mxu0 %v679
      %882 = vmatprep.subr.bf16.mxu0 %v676
      %883 = vmatpush1.bf16.msra.mxu0 %v675
      %884 = vmatprep.subr.bf16.mxu0 %v672
      %885 = vmatpush1.bf16.msra.mxu0 %v671
      %886 = vmatprep.subr.bf16.mxu0 %v732
      %887 = vmatpush2.bf16.msra.mxu0 %v731
      %888 = vmatprep.subr.bf16.mxu0 %v728
      %889 = vmatpush2.bf16.msra.mxu0 %v727
      %890 = vmatprep.subr.bf16.mxu0 %v724
      %891 = vmatpush2.bf16.msra.mxu0 %v723
      %892 = vmatprep.subr.bf16.mxu0 %v720
      %893 = vmatpush2.bf16.msra.mxu0 %v719
      %894 = vmatprep.subr.bf16.mxu0 %v716
      %895 = vmatpush2.bf16.msra.mxu0 %v715
      %896 = vmatprep.subr.bf16.mxu0 %v712
      %897 = vmatpush2.bf16.msra.mxu0 %v711
      %898 = vmatprep.subr.bf16.mxu0 %v708
      %899 = vmatpush2.bf16.msra.mxu0 %v707
      %900 = vmatprep.subr.bf16.mxu0 %v704
      %901 = vmatpush2.bf16.msra.mxu0 %v703
      %902 = vmatprep.mubr.bf16.mxu0 %v384
      %903 = vmatmul.mubr.bf16.gmra.mxu0 %v383
      %v904 = vpop.f32.mrf.mxu0
      %v905 = vadd.f32 %v468, %v904
      %v906 = vpop.f32.mrf.mxu0
      %v907 = vadd.f32 %v472, %v906
      %v908 = vpop.f32.mrf.mxu0
      %v909 = vadd.f32 %v468, %v908
      %v910 = vpop.f32.mrf.mxu0
      %v911 = vadd.f32 %v472, %v910
      %912 = vmatprep.mubr.bf16.mxu0 %v386
      %913 = vmatmul.mubr.bf16.gmra.mxu0 %v385
      %v914 = vpop.f32.mrf.mxu0
      %v915 = vadd.f32 %v468, %v914
      %v916 = vpop.f32.mrf.mxu0
      %v917 = vadd.f32 %v472, %v916
      %v918 = vpop.f32.mrf.mxu0
      %v919 = vadd.f32 %v468, %v918
      %v920 = vpop.f32.mrf.mxu0
      %v921 = vadd.f32 %v472, %v920
      %922 = vmatprep.mubr.bf16.mxu0 %v388
      %923 = vmatmul.mubr.bf16.gmra.mxu0 %v387
      %v924 = vpop.f32.mrf.mxu0
      %v925 = vadd.f32 %v468, %v924
      %v926 = vpop.f32.mrf.mxu0
      %v927 = vadd.f32 %v472, %v926
      %v928 = vpop.f32.mrf.mxu0
      %v929 = vadd.f32 %v468, %v928
      %v930 = vpop.f32.mrf.mxu0
      %v931 = vadd.f32 %v472, %v930
      %932 = vmatprep.mubr.bf16.mxu0 %v390
      %933 = vmatmul.mubr.bf16.gmra.mxu0 %v389
      %v934 = vpop.f32.mrf.mxu0
      %v935 = vadd.f32 %v468, %v934
      %v936 = vpop.f32.mrf.mxu0
      %v937 = vadd.f32 %v472, %v936
      %v938 = vpop.f32.mrf.mxu0
      %v939 = vadd.f32 %v468, %v938
      %v940 = vpop.f32.mrf.mxu0
      %v941 = vadd.f32 %v472, %v940
      %942 = vdwg.mxu0
      %v943 = vmax.f32 %v832, 0.0
      %v944 = vmax.f32 %v834, 0.0
      %v945 = vmax.f32 %v905, 0.0
      %v946 = vmax.f32 %v907, 0.0
      %v947 = vmax.f32 %v836, 0.0
      %v948 = vmax.f32 %v838, 0.0
      %v949 = vmax.f32 %v909, 0.0
      %v950 = vmax.f32 %v911, 0.0
      %v951 = vmax.f32 %v842, 0.0
      %v952 = vmax.f32 %v844, 0.0
      %v953 = vmax.f32 %v915, 0.0
      %v954 = vmax.f32 %v917, 0.0
      %v955 = vmax.f32 %v846, 0.0
      %v956 = vmax.f32 %v848, 0.0
      %v957 = vmax.f32 %v919, 0.0
      %v958 = vmax.f32 %v921, 0.0
      %v959 = vmax.f32 %v852, 0.0
      %v960 = vmax.f32 %v854, 0.0
      %v961 = vmax.f32 %v925, 0.0
      %v962 = vmax.f32 %v927, 0.0
      %v963 = vmax.f32 %v856, 0.0
      %v964 = vmax.f32 %v858, 0.0
      %v965 = vmax.f32 %v929, 0.0
      %v966 = vmax.f32 %v931, 0.0
      %v967 = vmax.f32 %v862, 0.0
      %v968 = vmax.f32 %v864, 0.0
      %v969 = vmax.f32 %v935, 0.0
      %v970 = vmax.f32 %v937, 0.0
      %v971 = vmax.f32 %v866, 0.0
      %v972 = vmax.f32 %v868, 0.0
      %v973 = vmax.f32 %v939, 0.0
      %v974 = vmax.f32 %v941, 0.0
      %v975 = vpack.c.bf16 %v947, %v943
      %v976 = vpack.c.bf16 %v948, %v944
      %v977 = vpack.c.bf16 %v949, %v945
      %v978 = vpack.c.bf16 %v950, %v946
      %v979 = vpack.c.bf16 %v955, %v951
      %v980 = vpack.c.bf16 %v956, %v952
      %v981 = vpack.c.bf16 %v957, %v953
      %v982 = vpack.c.bf16 %v958, %v954
      %v983 = vpack.c.bf16 %v963, %v959
      %v984 = vpack.c.bf16 %v964, %v960
      %v985 = vpack.c.bf16 %v965, %v961
      %v986 = vpack.c.bf16 %v966, %v962
      %v987 = vpack.c.bf16 %v971, %v967
      %v988 = vpack.c.bf16 %v972, %v968
      %v989 = vpack.c.bf16 %v973, %v969
      %v990 = vpack.c.bf16 %v974, %v970
      %v991 = vld [vmem:[%s4] sm:$0xff]
      %v992 = vld [vmem:[%s4 + $0x8] sm:$0xff]
      %v993 = vld [vmem:[%s4 + $0x10] sm:$0xff]
      %v994 = vld [vmem:[%s4 + $0x18] sm:$0xff]
      %v995 = vld [vmem:[%s4 + $0x20] sm:$0xff]
      %v996 = vld [vmem:[%s4 + $0x28] sm:$0xff]
      %v997 = vld [vmem:[%s4 + $0x30] sm:$0xff]
      %v998 = vld [vmem:[%s4 + $0x38] sm:$0xff]
      %v999 = vld [vmem:[%s4 + $0x40] sm:$0xff]
      %v1000 = vld [vmem:[%s4 + $0x48] sm:$0xff]
      %v1001 = vld [vmem:[%s4 + $0x50] sm:$0xff]
      %v1002 = vld [vmem:[%s4 + $0x58] sm:$0xff]
      %v1003 = vld [vmem:[%s4 + $0x60] sm:$0xff]
      %v1004 = vld [vmem:[%s4 + $0x68] sm:$0xff]
      %v1005 = vld [vmem:[%s4 + $0x70] sm:$0xff]
      %v1006 = vld [vmem:[%s4 + $0x78] sm:$0xff]
      %v1007 = vld [vmem:[%s4 + $0x80] sm:$0xff]
      %v1008 = vld [vmem:[%s4 + $0x88] sm:$0xff]
      %v1009 = vld [vmem:[%s4 + $0x90] sm:$0xff]
      %v1010 = vld [vmem:[%s4 + $0x98] sm:$0xff]
      %v1011 = vld [vmem:[%s4 + $0xa0] sm:$0xff]
      %v1012 = vld [vmem:[%s4 + $0xa8] sm:$0xff]
      %v1013 = vld [vmem:[%s4 + $0xb0] sm:$0xff]
      %v1014 = vld [vmem:[%s4 + $0xb8] sm:$0xff]
      %v1015 = vld [vmem:[%s4 + $0xc0] sm:$0xff]
      %v1016 = vld [vmem:[%s4 + $0xc8] sm:$0xff]
      %v1017 = vld [vmem:[%s4 + $0xd0] sm:$0xff]
      %v1018 = vld [vmem:[%s4 + $0xd8] sm:$0xff]
      %v1019 = vld [vmem:[%s4 + $0xe0] sm:$0xff]
      %v1020 = vld [vmem:[%s4 + $0xe8] sm:$0xff]
      %v1021 = vld [vmem:[%s4 + $0xf0] sm:$0xff]
      %v1022 = vld [vmem:[%s4 + $0xf8] sm:$0xff]
      %v1023 = vld [vmem:[%s4 + $0x100] sm:$0xff]
      %v1024 = vld [vmem:[%s4 + $0x108] sm:$0xff]
      %v1025 = vld [vmem:[%s4 + $0x110] sm:$0xff]
      %v1026 = vld [vmem:[%s4 + $0x118] sm:$0xff]
      %v1027 = vld [vmem:[%s4 + $0x120] sm:$0xff]
      %v1028 = vld [vmem:[%s4 + $0x128] sm:$0xff]
      %v1029 = vld [vmem:[%s4 + $0x130] sm:$0xff]
      %v1030 = vld [vmem:[%s4 + $0x138] sm:$0xff]
      %v1031 = vld [vmem:[%s4 + $0x140] sm:$0xff]
      %v1032 = vld [vmem:[%s4 + $0x148] sm:$0xff]
      %v1033 = vld [vmem:[%s4 + $0x150] sm:$0xff]
      %v1034 = vld [vmem:[%s4 + $0x158] sm:$0xff]
      %v1035 = vld [vmem:[%s4 + $0x160] sm:$0xff]
      %v1036 = vld [vmem:[%s4 + $0x168] sm:$0xff]
      %v1037 = vld [vmem:[%s4 + $0x170] sm:$0xff]
      %v1038 = vld [vmem:[%s4 + $0x178] sm:$0xff]
      %v1039 = vld [vmem:[%s4 + $0x180] sm:$0xff]
      %v1040 = vld [vmem:[%s4 + $0x188] sm:$0xff]
      %v1041 = vld [vmem:[%s4 + $0x190] sm:$0xff]
      %v1042 = vld [vmem:[%s4 + $0x198] sm:$0xff]
      %v1043 = vld [vmem:[%s4 + $0x1a0] sm:$0xff]
      %v1044 = vld [vmem:[%s4 + $0x1a8] sm:$0xff]
      %v1045 = vld [vmem:[%s4 + $0x1b0] sm:$0xff]
      %v1046 = vld [vmem:[%s4 + $0x1b8] sm:$0xff]
      %v1047 = vld [vmem:[%s4 + $0x1c0] sm:$0xff]
      %v1048 = vld [vmem:[%s4 + $0x1c8] sm:$0xff]
      %v1049 = vld [vmem:[%s4 + $0x1d0] sm:$0xff]
      %v1050 = vld [vmem:[%s4 + $0x1d8] sm:$0xff]
      %v1051 = vld [vmem:[%s4 + $0x1e0] sm:$0xff]
      %v1052 = vld [vmem:[%s4 + $0x1e8] sm:$0xff]
      %v1053 = vld [vmem:[%s4 + $0x1f0] sm:$0xff]
      %v1054 = vld [vmem:[%s4 + $0x1f8] sm:$0xff]
      %v1055 = vld [vmem:[%s4 + $0x200] sm:$0xff]
      %v1056 = vld [vmem:[%s4 + $0x208] sm:$0xff]
      %v1057 = vld [vmem:[%s4 + $0x210] sm:$0xff]
      %v1058 = vld [vmem:[%s4 + $0x218] sm:$0xff]
      %v1059 = vld [vmem:[%s4 + $0x220] sm:$0xff]
      %v1060 = vld [vmem:[%s4 + $0x228] sm:$0xff]
      %v1061 = vld [vmem:[%s4 + $0x230] sm:$0xff]
      %v1062 = vld [vmem:[%s4 + $0x238] sm:$0xff]
      %v1063 = vld [vmem:[%s4 + $0x240] sm:$0xff]
      %v1064 = vld [vmem:[%s4 + $0x248] sm:$0xff]
      %v1065 = vld [vmem:[%s4 + $0x250] sm:$0xff]
      %v1066 = vld [vmem:[%s4 + $0x258] sm:$0xff]
      %v1067 = vld [vmem:[%s4 + $0x260] sm:$0xff]
      %v1068 = vld [vmem:[%s4 + $0x268] sm:$0xff]
      %v1069 = vld [vmem:[%s4 + $0x270] sm:$0xff]
      %v1070 = vld [vmem:[%s4 + $0x278] sm:$0xff]
      %v1071 = vld [vmem:[%s4 + $0x280] sm:$0xff]
      %v1072 = vld [vmem:[%s4 + $0x288] sm:$0xff]
      %v1073 = vld [vmem:[%s4 + $0x290] sm:$0xff]
      %v1074 = vld [vmem:[%s4 + $0x298] sm:$0xff]
      %v1075 = vld [vmem:[%s4 + $0x2a0] sm:$0xff]
      %v1076 = vld [vmem:[%s4 + $0x2a8] sm:$0xff]
      %v1077 = vld [vmem:[%s4 + $0x2b0] sm:$0xff]
      %v1078 = vld [vmem:[%s4 + $0x2b8] sm:$0xff]
      %v1079 = vld [vmem:[%s4 + $0x2c0] sm:$0xff]
      %v1080 = vld [vmem:[%s4 + $0x2c8] sm:$0xff]
      %v1081 = vld [vmem:[%s4 + $0x2d0] sm:$0xff]
      %v1082 = vld [vmem:[%s4 + $0x2d8] sm:$0xff]
      %v1083 = vld [vmem:[%s4 + $0x2e0] sm:$0xff]
      %v1084 = vld [vmem:[%s4 + $0x2e8] sm:$0xff]
      %v1085 = vld [vmem:[%s4 + $0x2f0] sm:$0xff]
      %v1086 = vld [vmem:[%s4 + $0x2f8] sm:$0xff]
      %v1087 = vld [vmem:[%s4 + $0x300] sm:$0xff]
      %v1088 = vld [vmem:[%s4 + $0x308] sm:$0xff]
      %v1089 = vld [vmem:[%s4 + $0x310] sm:$0xff]
      %v1090 = vld [vmem:[%s4 + $0x318] sm:$0xff]
      %v1091 = vld [vmem:[%s4 + $0x320] sm:$0xff]
      %v1092 = vld [vmem:[%s4 + $0x328] sm:$0xff]
      %v1093 = vld [vmem:[%s4 + $0x330] sm:$0xff]
      %v1094 = vld [vmem:[%s4 + $0x338] sm:$0xff]
      %v1095 = vld [vmem:[%s4 + $0x340] sm:$0xff]
      %v1096 = vld [vmem:[%s4 + $0x348] sm:$0xff]
      %v1097 = vld [vmem:[%s4 + $0x350] sm:$0xff]
      %v1098 = vld [vmem:[%s4 + $0x358] sm:$0xff]
      %v1099 = vld [vmem:[%s4 + $0x360] sm:$0xff]
      %v1100 = vld [vmem:[%s4 + $0x368] sm:$0xff]
      %v1101 = vld [vmem:[%s4 + $0x370] sm:$0xff]
      %v1102 = vld [vmem:[%s4 + $0x378] sm:$0xff]
      %v1103 = vld [vmem:[%s4 + $0x380] sm:$0xff]
      %v1104 = vld [vmem:[%s4 + $0x388] sm:$0xff]
      %v1105 = vld [vmem:[%s4 + $0x390] sm:$0xff]
      %v1106 = vld [vmem:[%s4 + $0x398] sm:$0xff]
      %v1107 = vld [vmem:[%s4 + $0x3a0] sm:$0xff]
      %v1108 = vld [vmem:[%s4 + $0x3a8] sm:$0xff]
      %v1109 = vld [vmem:[%s4 + $0x3b0] sm:$0xff]
      %v1110 = vld [vmem:[%s4 + $0x3b8] sm:$0xff]
      %v1111 = vld [vmem:[%s4 + $0x3c0] sm:$0xff]
      %v1112 = vld [vmem:[%s4 + $0x3c8] sm:$0xff]
      %v1113 = vld [vmem:[%s4 + $0x3d0] sm:$0xff]
      %v1114 = vld [vmem:[%s4 + $0x3d8] sm:$0xff]
      %v1115 = vld [vmem:[%s4 + $0x3e0] sm:$0xff]
      %v1116 = vld [vmem:[%s4 + $0x3e8] sm:$0xff]
      %v1117 = vld [vmem:[%s4 + $0x3f0] sm:$0xff]
      %v1118 = vld [vmem:[%s4 + $0x3f8] sm:$0xff]
      %v1119 = vld [vmem:[%s4 + $0x400] sm:$0xff]
      %v1120 = vld [vmem:[%s4 + $0x408] sm:$0xff]
      %v1121 = vld [vmem:[%s4 + $0x410] sm:$0xff]
      %v1122 = vld [vmem:[%s4 + $0x418] sm:$0xff]
      %v1123 = vld [vmem:[%s4 + $0x420] sm:$0xff]
      %v1124 = vld [vmem:[%s4 + $0x428] sm:$0xff]
      %v1125 = vld [vmem:[%s4 + $0x430] sm:$0xff]
      %v1126 = vld [vmem:[%s4 + $0x438] sm:$0xff]
      %v1127 = vld [vmem:[%s4 + $0x440] sm:$0xff]
      %v1128 = vld [vmem:[%s4 + $0x448] sm:$0xff]
      %v1129 = vld [vmem:[%s4 + $0x450] sm:$0xff]
      %v1130 = vld [vmem:[%s4 + $0x458] sm:$0xff]
      %v1131 = vld [vmem:[%s4 + $0x460] sm:$0xff]
      %v1132 = vld [vmem:[%s4 + $0x468] sm:$0xff]
      %v1133 = vld [vmem:[%s4 + $0x470] sm:$0xff]
      %v1134 = vld [vmem:[%s4 + $0x478] sm:$0xff]
      %v1135 = vld [vmem:[%s4 + $0x480] sm:$0xff]
      %v1136 = vld [vmem:[%s4 + $0x488] sm:$0xff]
      %v1137 = vld [vmem:[%s4 + $0x490] sm:$0xff]
      %v1138 = vld [vmem:[%s4 + $0x498] sm:$0xff]
      %v1139 = vld [vmem:[%s4 + $0x4a0] sm:$0xff]
      %v1140 = vld [vmem:[%s4 + $0x4a8] sm:$0xff]
      %v1141 = vld [vmem:[%s4 + $0x4b0] sm:$0xff]
      %v1142 = vld [vmem:[%s4 + $0x4b8] sm:$0xff]
      %v1143 = vld [vmem:[%s4 + $0x4c0] sm:$0xff]
      %v1144 = vld [vmem:[%s4 + $0x4c8] sm:$0xff]
      %v1145 = vld [vmem:[%s4 + $0x4d0] sm:$0xff]
      %v1146 = vld [vmem:[%s4 + $0x4d8] sm:$0xff]
      %v1147 = vld [vmem:[%s4 + $0x4e0] sm:$0xff]
      %v1148 = vld [vmem:[%s4 + $0x4e8] sm:$0xff]
      %v1149 = vld [vmem:[%s4 + $0x4f0] sm:$0xff]
      %v1150 = vld [vmem:[%s4 + $0x4f8] sm:$0xff]
      %v1151 = vld [vmem:[%s4 + $0x500] sm:$0xff]
      %v1152 = vld [vmem:[%s4 + $0x508] sm:$0xff]
      %v1153 = vld [vmem:[%s4 + $0x510] sm:$0xff]
      %v1154 = vld [vmem:[%s4 + $0x518] sm:$0xff]
      %v1155 = vld [vmem:[%s4 + $0x520] sm:$0xff]
      %v1156 = vld [vmem:[%s4 + $0x528] sm:$0xff]
      %v1157 = vld [vmem:[%s4 + $0x530] sm:$0xff]
      %v1158 = vld [vmem:[%s4 + $0x538] sm:$0xff]
      %v1159 = vld [vmem:[%s4 + $0x540] sm:$0xff]
      %v1160 = vld [vmem:[%s4 + $0x548] sm:$0xff]
      %v1161 = vld [vmem:[%s4 + $0x550] sm:$0xff]
      %v1162 = vld [vmem:[%s4 + $0x558] sm:$0xff]
      %v1163 = vld [vmem:[%s4 + $0x560] sm:$0xff]
      %v1164 = vld [vmem:[%s4 + $0x568] sm:$0xff]
      %v1165 = vld [vmem:[%s4 + $0x570] sm:$0xff]
      %v1166 = vld [vmem:[%s4 + $0x578] sm:$0xff]
      %v1167 = vld [vmem:[%s4 + $0x580] sm:$0xff]
      %v1168 = vld [vmem:[%s4 + $0x588] sm:$0xff]
      %v1169 = vld [vmem:[%s4 + $0x590] sm:$0xff]
      %v1170 = vld [vmem:[%s4 + $0x598] sm:$0xff]
      %v1171 = vld [vmem:[%s4 + $0x5a0] sm:$0xff]
      %v1172 = vld [vmem:[%s4 + $0x5a8] sm:$0xff]
      %v1173 = vld [vmem:[%s4 + $0x5b0] sm:$0xff]
      %v1174 = vld [vmem:[%s4 + $0x5b8] sm:$0xff]
      %v1175 = vld [vmem:[%s4 + $0x5c0] sm:$0xff]
      %v1176 = vld [vmem:[%s4 + $0x5c8] sm:$0xff]
      %v1177 = vld [vmem:[%s4 + $0x5d0] sm:$0xff]
      %v1178 = vld [vmem:[%s4 + $0x5d8] sm:$0xff]
      %v1179 = vld [vmem:[%s4 + $0x5e0] sm:$0xff]
      %v1180 = vld [vmem:[%s4 + $0x5e8] sm:$0xff]
      %v1181 = vld [vmem:[%s4 + $0x5f0] sm:$0xff]
      %v1182 = vld [vmem:[%s4 + $0x5f8] sm:$0xff]
      %v1183 = vld [vmem:[%s4 + $0x600] sm:$0xff]
      %v1184 = vld [vmem:[%s4 + $0x608] sm:$0xff]
      %v1185 = vld [vmem:[%s4 + $0x610] sm:$0xff]
      %v1186 = vld [vmem:[%s4 + $0x618] sm:$0xff]
      %v1187 = vld [vmem:[%s4 + $0x620] sm:$0xff]
      %v1188 = vld [vmem:[%s4 + $0x628] sm:$0xff]
      %v1189 = vld [vmem:[%s4 + $0x630] sm:$0xff]
      %v1190 = vld [vmem:[%s4 + $0x638] sm:$0xff]
      %v1191 = vld [vmem:[%s4 + $0x640] sm:$0xff]
      %v1192 = vld [vmem:[%s4 + $0x648] sm:$0xff]
      %v1193 = vld [vmem:[%s4 + $0x650] sm:$0xff]
      %v1194 = vld [vmem:[%s4 + $0x658] sm:$0xff]
      %v1195 = vld [vmem:[%s4 + $0x660] sm:$0xff]
      %v1196 = vld [vmem:[%s4 + $0x668] sm:$0xff]
      %v1197 = vld [vmem:[%s4 + $0x670] sm:$0xff]
      %v1198 = vld [vmem:[%s4 + $0x678] sm:$0xff]
      %v1199 = vld [vmem:[%s4 + $0x680] sm:$0xff]
      %v1200 = vld [vmem:[%s4 + $0x688] sm:$0xff]
      %v1201 = vld [vmem:[%s4 + $0x690] sm:$0xff]
      %v1202 = vld [vmem:[%s4 + $0x698] sm:$0xff]
      %v1203 = vld [vmem:[%s4 + $0x6a0] sm:$0xff]
      %v1204 = vld [vmem:[%s4 + $0x6a8] sm:$0xff]
      %v1205 = vld [vmem:[%s4 + $0x6b0] sm:$0xff]
      %v1206 = vld [vmem:[%s4 + $0x6b8] sm:$0xff]
      %v1207 = vld [vmem:[%s4 + $0x6c0] sm:$0xff]
      %v1208 = vld [vmem:[%s4 + $0x6c8] sm:$0xff]
      %v1209 = vld [vmem:[%s4 + $0x6d0] sm:$0xff]
      %v1210 = vld [vmem:[%s4 + $0x6d8] sm:$0xff]
      %v1211 = vld [vmem:[%s4 + $0x6e0] sm:$0xff]
      %v1212 = vld [vmem:[%s4 + $0x6e8] sm:$0xff]
      %v1213 = vld [vmem:[%s4 + $0x6f0] sm:$0xff]
      %v1214 = vld [vmem:[%s4 + $0x6f8] sm:$0xff]
      %v1215 = vld [vmem:[%s4 + $0x700] sm:$0xff]
      %v1216 = vld [vmem:[%s4 + $0x708] sm:$0xff]
      %v1217 = vld [vmem:[%s4 + $0x710] sm:$0xff]
      %v1218 = vld [vmem:[%s4 + $0x718] sm:$0xff]
      %v1219 = vld [vmem:[%s4 + $0x720] sm:$0xff]
      %v1220 = vld [vmem:[%s4 + $0x728] sm:$0xff]
      %v1221 = vld [vmem:[%s4 + $0x730] sm:$0xff]
      %v1222 = vld [vmem:[%s4 + $0x738] sm:$0xff]
      %v1223 = vld [vmem:[%s4 + $0x740] sm:$0xff]
      %v1224 = vld [vmem:[%s4 + $0x748] sm:$0xff]
      %v1225 = vld [vmem:[%s4 + $0x750] sm:$0xff]
      %v1226 = vld [vmem:[%s4 + $0x758] sm:$0xff]
      %v1227 = vld [vmem:[%s4 + $0x760] sm:$0xff]
      %v1228 = vld [vmem:[%s4 + $0x768] sm:$0xff]
      %v1229 = vld [vmem:[%s4 + $0x770] sm:$0xff]
      %v1230 = vld [vmem:[%s4 + $0x778] sm:$0xff]
      %v1231 = vld [vmem:[%s4 + $0x780] sm:$0xff]
      %v1232 = vld [vmem:[%s4 + $0x788] sm:$0xff]
      %v1233 = vld [vmem:[%s4 + $0x790] sm:$0xff]
      %v1234 = vld [vmem:[%s4 + $0x798] sm:$0xff]
      %v1235 = vld [vmem:[%s4 + $0x7a0] sm:$0xff]
      %v1236 = vld [vmem:[%s4 + $0x7a8] sm:$0xff]
      %v1237 = vld [vmem:[%s4 + $0x7b0] sm:$0xff]
      %v1238 = vld [vmem:[%s4 + $0x7b8] sm:$0xff]
      %v1239 = vld [vmem:[%s4 + $0x7c0] sm:$0xff]
      %v1240 = vld [vmem:[%s4 + $0x7c8] sm:$0xff]
      %v1241 = vld [vmem:[%s4 + $0x7d0] sm:$0xff]
      %v1242 = vld [vmem:[%s4 + $0x7d8] sm:$0xff]
      %v1243 = vld [vmem:[%s4 + $0x7e0] sm:$0xff]
      %v1244 = vld [vmem:[%s4 + $0x7e8] sm:$0xff]
      %v1245 = vld [vmem:[%s4 + $0x7f0] sm:$0xff]
      %v1246 = vld [vmem:[%s4 + $0x7f8] sm:$0xff]
      %v1503 = vunpack.c.l.b16 %v991
      %v1504 = vunpack.c.h.b16 %v991
      %v1505 = vunpack.c.l.b16 %v992
      %v1506 = vunpack.c.h.b16 %v992
      %v1507 = vunpack.c.l.b16 %v993
      %v1508 = vunpack.c.h.b16 %v993
      %v1509 = vunpack.c.l.b16 %v994
      %v1510 = vunpack.c.h.b16 %v994
      %v1511 = vunpack.c.l.b16 %v995
      %v1512 = vunpack.c.h.b16 %v995
      %v1513 = vunpack.c.l.b16 %v996
      %v1514 = vunpack.c.h.b16 %v996
      %v1515 = vunpack.c.l.b16 %v997
      %v1516 = vunpack.c.h.b16 %v997
      %v1517 = vunpack.c.l.b16 %v998
      %v1518 = vunpack.c.h.b16 %v998
      %v1519 = vunpack.c.l.b16 %v999
      %v1520 = vunpack.c.h.b16 %v999
      %v1521 = vunpack.c.l.b16 %v1000
      %v1522 = vunpack.c.h.b16 %v1000
      %v1523 = vunpack.c.l.b16 %v1001
      %v1524 = vunpack.c.h.b16 %v1001
      %v1525 = vunpack.c.l.b16 %v1002
      %v1526 = vunpack.c.h.b16 %v1002
      %v1527 = vunpack.c.l.b16 %v1003
      %v1528 = vunpack.c.h.b16 %v1003
      %v1529 = vunpack.c.l.b16 %v1004
      %v1530 = vunpack.c.h.b16 %v1004
      %v1531 = vunpack.c.l.b16 %v1005
      %v1532 = vunpack.c.h.b16 %v1005
      %v1533 = vunpack.c.l.b16 %v1006
      %v1534 = vunpack.c.h.b16 %v1006
      %v1535 = vunpack.c.l.b16 %v1007
      %v1536 = vunpack.c.h.b16 %v1007
      %v1537 = vunpack.c.l.b16 %v1008
      %v1538 = vunpack.c.h.b16 %v1008
      %v1539 = vunpack.c.l.b16 %v1009
      %v1540 = vunpack.c.h.b16 %v1009
      %v1541 = vunpack.c.l.b16 %v1010
      %v1542 = vunpack.c.h.b16 %v1010
      %v1543 = vunpack.c.l.b16 %v1011
      %v1544 = vunpack.c.h.b16 %v1011
      %v1545 = vunpack.c.l.b16 %v1012
      %v1546 = vunpack.c.h.b16 %v1012
      %v1547 = vunpack.c.l.b16 %v1013
      %v1548 = vunpack.c.h.b16 %v1013
      %v1549 = vunpack.c.l.b16 %v1014
      %v1550 = vunpack.c.h.b16 %v1014
      %v1551 = vunpack.c.l.b16 %v1015
      %v1552 = vunpack.c.h.b16 %v1015
      %v1553 = vunpack.c.l.b16 %v1016
      %v1554 = vunpack.c.h.b16 %v1016
      %v1555 = vunpack.c.l.b16 %v1017
      %v1556 = vunpack.c.h.b16 %v1017
      %v1557 = vunpack.c.l.b16 %v1018
      %v1558 = vunpack.c.h.b16 %v1018
      %v1559 = vunpack.c.l.b16 %v1019
      %v1560 = vunpack.c.h.b16 %v1019
      %v1561 = vunpack.c.l.b16 %v1020
      %v1562 = vunpack.c.h.b16 %v1020
      %v1563 = vunpack.c.l.b16 %v1021
      %v1564 = vunpack.c.h.b16 %v1021
      %v1565 = vunpack.c.l.b16 %v1022
      %v1566 = vunpack.c.h.b16 %v1022
      %v1567 = vunpack.c.l.b16 %v1023
      %v1568 = vunpack.c.h.b16 %v1023
      %v1569 = vunpack.c.l.b16 %v1024
      %v1570 = vunpack.c.h.b16 %v1024
      %v1571 = vunpack.c.l.b16 %v1025
      %v1572 = vunpack.c.h.b16 %v1025
      %v1573 = vunpack.c.l.b16 %v1026
      %v1574 = vunpack.c.h.b16 %v1026
      %v1575 = vunpack.c.l.b16 %v1027
      %v1576 = vunpack.c.h.b16 %v1027
      %v1577 = vunpack.c.l.b16 %v1028
      %v1578 = vunpack.c.h.b16 %v1028
      %v1579 = vunpack.c.l.b16 %v1029
      %v1580 = vunpack.c.h.b16 %v1029
      %v1581 = vunpack.c.l.b16 %v1030
      %v1582 = vunpack.c.h.b16 %v1030
      %v1583 = vunpack.c.l.b16 %v1031
      %v1584 = vunpack.c.h.b16 %v1031
      %v1585 = vunpack.c.l.b16 %v1032
      %v1586 = vunpack.c.h.b16 %v1032
      %v1587 = vunpack.c.l.b16 %v1033
      %v1588 = vunpack.c.h.b16 %v1033
      %v1589 = vunpack.c.l.b16 %v1034
      %v1590 = vunpack.c.h.b16 %v1034
      %v1591 = vunpack.c.l.b16 %v1035
      %v1592 = vunpack.c.h.b16 %v1035
      %v1593 = vunpack.c.l.b16 %v1036
      %v1594 = vunpack.c.h.b16 %v1036
      %v1595 = vunpack.c.l.b16 %v1037
      %v1596 = vunpack.c.h.b16 %v1037
      %v1597 = vunpack.c.l.b16 %v1038
      %v1598 = vunpack.c.h.b16 %v1038
      %v1599 = vunpack.c.l.b16 %v1039
      %v1600 = vunpack.c.h.b16 %v1039
      %v1601 = vunpack.c.l.b16 %v1040
      %v1602 = vunpack.c.h.b16 %v1040
      %v1603 = vunpack.c.l.b16 %v1041
      %v1604 = vunpack.c.h.b16 %v1041
      %v1605 = vunpack.c.l.b16 %v1042
      %v1606 = vunpack.c.h.b16 %v1042
      %v1607 = vunpack.c.l.b16 %v1043
      %v1608 = vunpack.c.h.b16 %v1043
      %v1609 = vunpack.c.l.b16 %v1044
      %v1610 = vunpack.c.h.b16 %v1044
      %v1611 = vunpack.c.l.b16 %v1045
      %v1612 = vunpack.c.h.b16 %v1045
      %v1613 = vunpack.c.l.b16 %v1046
      %v1614 = vunpack.c.h.b16 %v1046
      %v1615 = vunpack.c.l.b16 %v1047
      %v1616 = vunpack.c.h.b16 %v1047
      %v1617 = vunpack.c.l.b16 %v1048
      %v1618 = vunpack.c.h.b16 %v1048
      %v1619 = vunpack.c.l.b16 %v1049
      %v1620 = vunpack.c.h.b16 %v1049
      %v1621 = vunpack.c.l.b16 %v1050
      %v1622 = vunpack.c.h.b16 %v1050
      %v1623 = vunpack.c.l.b16 %v1051
      %v1624 = vunpack.c.h.b16 %v1051
      %v1625 = vunpack.c.l.b16 %v1052
      %v1626 = vunpack.c.h.b16 %v1052
      %v1627 = vunpack.c.l.b16 %v1053
      %v1628 = vunpack.c.h.b16 %v1053
      %v1629 = vunpack.c.l.b16 %v1054
      %v1630 = vunpack.c.h.b16 %v1054
      %v1631 = vunpack.c.l.b16 %v1055
      %v1632 = vunpack.c.h.b16 %v1055
      %v1633 = vunpack.c.l.b16 %v1056
      %v1634 = vunpack.c.h.b16 %v1056
      %v1635 = vunpack.c.l.b16 %v1057
      %v1636 = vunpack.c.h.b16 %v1057
      %v1637 = vunpack.c.l.b16 %v1058
      %v1638 = vunpack.c.h.b16 %v1058
      %v1639 = vunpack.c.l.b16 %v1059
      %v1640 = vunpack.c.h.b16 %v1059
      %v1641 = vunpack.c.l.b16 %v1060
      %v1642 = vunpack.c.h.b16 %v1060
      %v1643 = vunpack.c.l.b16 %v1061
      %v1644 = vunpack.c.h.b16 %v1061
      %v1645 = vunpack.c.l.b16 %v1062
      %v1646 = vunpack.c.h.b16 %v1062
      %v1647 = vunpack.c.l.b16 %v1063
      %v1648 = vunpack.c.h.b16 %v1063
      %v1649 = vunpack.c.l.b16 %v1064
      %v1650 = vunpack.c.h.b16 %v1064
      %v1651 = vunpack.c.l.b16 %v1065
      %v1652 = vunpack.c.h.b16 %v1065
      %v1653 = vunpack.c.l.b16 %v1066
      %v1654 = vunpack.c.h.b16 %v1066
      %v1655 = vunpack.c.l.b16 %v1067
      %v1656 = vunpack.c.h.b16 %v1067
      %v1657 = vunpack.c.l.b16 %v1068
      %v1658 = vunpack.c.h.b16 %v1068
      %v1659 = vunpack.c.l.b16 %v1069
      %v1660 = vunpack.c.h.b16 %v1069
      %v1661 = vunpack.c.l.b16 %v1070
      %v1662 = vunpack.c.h.b16 %v1070
      %v1663 = vunpack.c.l.b16 %v1071
      %v1664 = vunpack.c.h.b16 %v1071
      %v1665 = vunpack.c.l.b16 %v1072
      %v1666 = vunpack.c.h.b16 %v1072
      %v1667 = vunpack.c.l.b16 %v1073
      %v1668 = vunpack.c.h.b16 %v1073
      %v1669 = vunpack.c.l.b16 %v1074
      %v1670 = vunpack.c.h.b16 %v1074
      %v1671 = vunpack.c.l.b16 %v1075
      %v1672 = vunpack.c.h.b16 %v1075
      %v1673 = vunpack.c.l.b16 %v1076
      %v1674 = vunpack.c.h.b16 %v1076
      %v1675 = vunpack.c.l.b16 %v1077
      %v1676 = vunpack.c.h.b16 %v1077
      %v1677 = vunpack.c.l.b16 %v1078
      %v1678 = vunpack.c.h.b16 %v1078
      %v1679 = vunpack.c.l.b16 %v1079
      %v1680 = vunpack.c.h.b16 %v1079
      %v1681 = vunpack.c.l.b16 %v1080
      %v1682 = vunpack.c.h.b16 %v1080
      %v1683 = vunpack.c.l.b16 %v1081
      %v1684 = vunpack.c.h.b16 %v1081
      %v1685 = vunpack.c.l.b16 %v1082
      %v1686 = vunpack.c.h.b16 %v1082
      %v1687 = vunpack.c.l.b16 %v1083
      %v1688 = vunpack.c.h.b16 %v1083
      %v1689 = vunpack.c.l.b16 %v1084
      %v1690 = vunpack.c.h.b16 %v1084
      %v1691 = vunpack.c.l.b16 %v1085
      %v1692 = vunpack.c.h.b16 %v1085
      %v1693 = vunpack.c.l.b16 %v1086
      %v1694 = vunpack.c.h.b16 %v1086
      %v1695 = vunpack.c.l.b16 %v1087
      %v1696 = vunpack.c.h.b16 %v1087
      %v1697 = vunpack.c.l.b16 %v1088
      %v1698 = vunpack.c.h.b16 %v1088
      %v1699 = vunpack.c.l.b16 %v1089
      %v1700 = vunpack.c.h.b16 %v1089
      %v1701 = vunpack.c.l.b16 %v1090
      %v1702 = vunpack.c.h.b16 %v1090
      %v1703 = vunpack.c.l.b16 %v1091
      %v1704 = vunpack.c.h.b16 %v1091
      %v1705 = vunpack.c.l.b16 %v1092
      %v1706 = vunpack.c.h.b16 %v1092
      %v1707 = vunpack.c.l.b16 %v1093
      %v1708 = vunpack.c.h.b16 %v1093
      %v1709 = vunpack.c.l.b16 %v1094
      %v1710 = vunpack.c.h.b16 %v1094
      %v1711 = vunpack.c.l.b16 %v1095
      %v1712 = vunpack.c.h.b16 %v1095
      %v1713 = vunpack.c.l.b16 %v1096
      %v1714 = vunpack.c.h.b16 %v1096
      %v1715 = vunpack.c.l.b16 %v1097
      %v1716 = vunpack.c.h.b16 %v1097
      %v1717 = vunpack.c.l.b16 %v1098
      %v1718 = vunpack.c.h.b16 %v1098
      %v1719 = vunpack.c.l.b16 %v1099
      %v1720 = vunpack.c.h.b16 %v1099
      %v1721 = vunpack.c.l.b16 %v1100
      %v1722 = vunpack.c.h.b16 %v1100
      %v1723 = vunpack.c.l.b16 %v1101
      %v1724 = vunpack.c.h.b16 %v1101
      %v1725 = vunpack.c.l.b16 %v1102
      %v1726 = vunpack.c.h.b16 %v1102
      %v1727 = vunpack.c.l.b16 %v1103
      %v1728 = vunpack.c.h.b16 %v1103
      %v1729 = vunpack.c.l.b16 %v1104
      %v1730 = vunpack.c.h.b16 %v1104
      %v1731 = vunpack.c.l.b16 %v1105
      %v1732 = vunpack.c.h.b16 %v1105
      %v1733 = vunpack.c.l.b16 %v1106
      %v1734 = vunpack.c.h.b16 %v1106
      %v1735 = vunpack.c.l.b16 %v1107
      %v1736 = vunpack.c.h.b16 %v1107
      %v1737 = vunpack.c.l.b16 %v1108
      %v1738 = vunpack.c.h.b16 %v1108
      %v1739 = vunpack.c.l.b16 %v1109
      %v1740 = vunpack.c.h.b16 %v1109
      %v1741 = vunpack.c.l.b16 %v1110
      %v1742 = vunpack.c.h.b16 %v1110
      %v1743 = vunpack.c.l.b16 %v1111
      %v1744 = vunpack.c.h.b16 %v1111
      %v1745 = vunpack.c.l.b16 %v1112
      %v1746 = vunpack.c.h.b16 %v1112
      %v1747 = vunpack.c.l.b16 %v1113
      %v1748 = vunpack.c.h.b16 %v1113
      %v1749 = vunpack.c.l.b16 %v1114
      %v1750 = vunpack.c.h.b16 %v1114
      %v1751 = vunpack.c.l.b16 %v1115
      %v1752 = vunpack.c.h.b16 %v1115
      %v1753 = vunpack.c.l.b16 %v1116
      %v1754 = vunpack.c.h.b16 %v1116
      %v1755 = vunpack.c.l.b16 %v1117
      %v1756 = vunpack.c.h.b16 %v1117
      %v1757 = vunpack.c.l.b16 %v1118
      %v1758 = vunpack.c.h.b16 %v1118
      %v1759 = vunpack.c.l.b16 %v1119
      %v1760 = vunpack.c.h.b16 %v1119
      %v1761 = vunpack.c.l.b16 %v1120
      %v1762 = vunpack.c.h.b16 %v1120
      %v1763 = vunpack.c.l.b16 %v1121
      %v1764 = vunpack.c.h.b16 %v1121
      %v1765 = vunpack.c.l.b16 %v1122
      %v1766 = vunpack.c.h.b16 %v1122
      %v1767 = vunpack.c.l.b16 %v1123
      %v1768 = vunpack.c.h.b16 %v1123
      %v1769 = vunpack.c.l.b16 %v1124
      %v1770 = vunpack.c.h.b16 %v1124
      %v1771 = vunpack.c.l.b16 %v1125
      %v1772 = vunpack.c.h.b16 %v1125
      %v1773 = vunpack.c.l.b16 %v1126
      %v1774 = vunpack.c.h.b16 %v1126
      %v1775 = vunpack.c.l.b16 %v1127
      %v1776 = vunpack.c.h.b16 %v1127
      %v1777 = vunpack.c.l.b16 %v1128
      %v1778 = vunpack.c.h.b16 %v1128
      %v1779 = vunpack.c.l.b16 %v1129
      %v1780 = vunpack.c.h.b16 %v1129
      %v1781 = vunpack.c.l.b16 %v1130
      %v1782 = vunpack.c.h.b16 %v1130
      %v1783 = vunpack.c.l.b16 %v1131
      %v1784 = vunpack.c.h.b16 %v1131
      %v1785 = vunpack.c.l.b16 %v1132
      %v1786 = vunpack.c.h.b16 %v1132
      %v1787 = vunpack.c.l.b16 %v1133
      %v1788 = vunpack.c.h.b16 %v1133
      %v1789 = vunpack.c.l.b16 %v1134
      %v1790 = vunpack.c.h.b16 %v1134
      %v1791 = vunpack.c.l.b16 %v1135
      %v1792 = vunpack.c.h.b16 %v1135
      %v1793 = vunpack.c.l.b16 %v1136
      %v1794 = vunpack.c.h.b16 %v1136
      %v1795 = vunpack.c.l.b16 %v1137
      %v1796 = vunpack.c.h.b16 %v1137
      %v1797 = vunpack.c.l.b16 %v1138
      %v1798 = vunpack.c.h.b16 %v1138
      %v1799 = vunpack.c.l.b16 %v1139
      %v1800 = vunpack.c.h.b16 %v1139
      %v1801 = vunpack.c.l.b16 %v1140
      %v1802 = vunpack.c.h.b16 %v1140
      %v1803 = vunpack.c.l.b16 %v1141
      %v1804 = vunpack.c.h.b16 %v1141
      %v1805 = vunpack.c.l.b16 %v1142
      %v1806 = vunpack.c.h.b16 %v1142
      %v1807 = vunpack.c.l.b16 %v1143
      %v1808 = vunpack.c.h.b16 %v1143
      %v1809 = vunpack.c.l.b16 %v1144
      %v1810 = vunpack.c.h.b16 %v1144
      %v1811 = vunpack.c.l.b16 %v1145
      %v1812 = vunpack.c.h.b16 %v1145
      %v1813 = vunpack.c.l.b16 %v1146
      %v1814 = vunpack.c.h.b16 %v1146
      %v1815 = vunpack.c.l.b16 %v1147
      %v1816 = vunpack.c.h.b16 %v1147
      %v1817 = vunpack.c.l.b16 %v1148
      %v1818 = vunpack.c.h.b16 %v1148
      %v1819 = vunpack.c.l.b16 %v1149
      %v1820 = vunpack.c.h.b16 %v1149
      %v1821 = vunpack.c.l.b16 %v1150
      %v1822 = vunpack.c.h.b16 %v1150
      %v1823 = vunpack.c.l.b16 %v1151
      %v1824 = vunpack.c.h.b16 %v1151
      %v1825 = vunpack.c.l.b16 %v1152
      %v1826 = vunpack.c.h.b16 %v1152
      %v1827 = vunpack.c.l.b16 %v1153
      %v1828 = vunpack.c.h.b16 %v1153
      %v1829 = vunpack.c.l.b16 %v1154
      %v1830 = vunpack.c.h.b16 %v1154
      %v1831 = vunpack.c.l.b16 %v1155
      %v1832 = vunpack.c.h.b16 %v1155
      %v1833 = vunpack.c.l.b16 %v1156
      %v1834 = vunpack.c.h.b16 %v1156
      %v1835 = vunpack.c.l.b16 %v1157
      %v1836 = vunpack.c.h.b16 %v1157
      %v1837 = vunpack.c.l.b16 %v1158
      %v1838 = vunpack.c.h.b16 %v1158
      %v1839 = vunpack.c.l.b16 %v1159
      %v1840 = vunpack.c.h.b16 %v1159
      %v1841 = vunpack.c.l.b16 %v1160
      %v1842 = vunpack.c.h.b16 %v1160
      %v1843 = vunpack.c.l.b16 %v1161
      %v1844 = vunpack.c.h.b16 %v1161
      %v1845 = vunpack.c.l.b16 %v1162
      %v1846 = vunpack.c.h.b16 %v1162
      %v1847 = vunpack.c.l.b16 %v1163
      %v1848 = vunpack.c.h.b16 %v1163
      %v1849 = vunpack.c.l.b16 %v1164
      %v1850 = vunpack.c.h.b16 %v1164
      %v1851 = vunpack.c.l.b16 %v1165
      %v1852 = vunpack.c.h.b16 %v1165
      %v1853 = vunpack.c.l.b16 %v1166
      %v1854 = vunpack.c.h.b16 %v1166
      %v1855 = vunpack.c.l.b16 %v1167
      %v1856 = vunpack.c.h.b16 %v1167
      %v1857 = vunpack.c.l.b16 %v1168
      %v1858 = vunpack.c.h.b16 %v1168
      %v1859 = vunpack.c.l.b16 %v1169
      %v1860 = vunpack.c.h.b16 %v1169
      %v1861 = vunpack.c.l.b16 %v1170
      %v1862 = vunpack.c.h.b16 %v1170
      %v1863 = vunpack.c.l.b16 %v1171
      %v1864 = vunpack.c.h.b16 %v1171
      %v1865 = vunpack.c.l.b16 %v1172
      %v1866 = vunpack.c.h.b16 %v1172
      %v1867 = vunpack.c.l.b16 %v1173
      %v1868 = vunpack.c.h.b16 %v1173
      %v1869 = vunpack.c.l.b16 %v1174
      %v1870 = vunpack.c.h.b16 %v1174
      %v1871 = vunpack.c.l.b16 %v1175
      %v1872 = vunpack.c.h.b16 %v1175
      %v1873 = vunpack.c.l.b16 %v1176
      %v1874 = vunpack.c.h.b16 %v1176
      %v1875 = vunpack.c.l.b16 %v1177
      %v1876 = vunpack.c.h.b16 %v1177
      %v1877 = vunpack.c.l.b16 %v1178
      %v1878 = vunpack.c.h.b16 %v1178
      %v1879 = vunpack.c.l.b16 %v1179
      %v1880 = vunpack.c.h.b16 %v1179
      %v1881 = vunpack.c.l.b16 %v1180
      %v1882 = vunpack.c.h.b16 %v1180
      %v1883 = vunpack.c.l.b16 %v1181
      %v1884 = vunpack.c.h.b16 %v1181
      %v1885 = vunpack.c.l.b16 %v1182
      %v1886 = vunpack.c.h.b16 %v1182
      %v1887 = vunpack.c.l.b16 %v1183
      %v1888 = vunpack.c.h.b16 %v1183
      %v1889 = vunpack.c.l.b16 %v1184
      %v1890 = vunpack.c.h.b16 %v1184
      %v1891 = vunpack.c.l.b16 %v1185
      %v1892 = vunpack.c.h.b16 %v1185
      %v1893 = vunpack.c.l.b16 %v1186
      %v1894 = vunpack.c.h.b16 %v1186
      %v1895 = vunpack.c.l.b16 %v1187
      %v1896 = vunpack.c.h.b16 %v1187
      %v1897 = vunpack.c.l.b16 %v1188
      %v1898 = vunpack.c.h.b16 %v1188
      %v1899 = vunpack.c.l.b16 %v1189
      %v1900 = vunpack.c.h.b16 %v1189
      %v1901 = vunpack.c.l.b16 %v1190
      %v1902 = vunpack.c.h.b16 %v1190
      %v1903 = vunpack.c.l.b16 %v1191
      %v1904 = vunpack.c.h.b16 %v1191
      %v1905 = vunpack.c.l.b16 %v1192
      %v1906 = vunpack.c.h.b16 %v1192
      %v1907 = vunpack.c.l.b16 %v1193
      %v1908 = vunpack.c.h.b16 %v1193
      %v1909 = vunpack.c.l.b16 %v1194
      %v1910 = vunpack.c.h.b16 %v1194
      %v1911 = vunpack.c.l.b16 %v1195
      %v1912 = vunpack.c.h.b16 %v1195
      %v1913 = vunpack.c.l.b16 %v1196
      %v1914 = vunpack.c.h.b16 %v1196
      %v1915 = vunpack.c.l.b16 %v1197
      %v1916 = vunpack.c.h.b16 %v1197
      %v1917 = vunpack.c.l.b16 %v1198
      %v1918 = vunpack.c.h.b16 %v1198
      %v1919 = vunpack.c.l.b16 %v1199
      %v1920 = vunpack.c.h.b16 %v1199
      %v1921 = vunpack.c.l.b16 %v1200
      %v1922 = vunpack.c.h.b16 %v1200
      %v1923 = vunpack.c.l.b16 %v1201
      %v1924 = vunpack.c.h.b16 %v1201
      %v1925 = vunpack.c.l.b16 %v1202
      %v1926 = vunpack.c.h.b16 %v1202
      %v1927 = vunpack.c.l.b16 %v1203
      %v1928 = vunpack.c.h.b16 %v1203
      %v1929 = vunpack.c.l.b16 %v1204
      %v1930 = vunpack.c.h.b16 %v1204
      %v1931 = vunpack.c.l.b16 %v1205
      %v1932 = vunpack.c.h.b16 %v1205
      %v1933 = vunpack.c.l.b16 %v1206
      %v1934 = vunpack.c.h.b16 %v1206
      %v1935 = vunpack.c.l.b16 %v1207
      %v1936 = vunpack.c.h.b16 %v1207
      %v1937 = vunpack.c.l.b16 %v1208
      %v1938 = vunpack.c.h.b16 %v1208
      %v1939 = vunpack.c.l.b16 %v1209
      %v1940 = vunpack.c.h.b16 %v1209
      %v1941 = vunpack.c.l.b16 %v1210
      %v1942 = vunpack.c.h.b16 %v1210
      %v1943 = vunpack.c.l.b16 %v1211
      %v1944 = vunpack.c.h.b16 %v1211
      %v1945 = vunpack.c.l.b16 %v1212
      %v1946 = vunpack.c.h.b16 %v1212
      %v1947 = vunpack.c.l.b16 %v1213
      %v1948 = vunpack.c.h.b16 %v1213
      %v1949 = vunpack.c.l.b16 %v1214
      %v1950 = vunpack.c.h.b16 %v1214
      %v1951 = vunpack.c.l.b16 %v1215
      %v1952 = vunpack.c.h.b16 %v1215
      %v1953 = vunpack.c.l.b16 %v1216
      %v1954 = vunpack.c.h.b16 %v1216
      %v1955 = vunpack.c.l.b16 %v1217
      %v1956 = vunpack.c.h.b16 %v1217
      %v1957 = vunpack.c.l.b16 %v1218
      %v1958 = vunpack.c.h.b16 %v1218
      %v1959 = vunpack.c.l.b16 %v1219
      %v1960 = vunpack.c.h.b16 %v1219
      %v1961 = vunpack.c.l.b16 %v1220
      %v1962 = vunpack.c.h.b16 %v1220
      %v1963 = vunpack.c.l.b16 %v1221
      %v1964 = vunpack.c.h.b16 %v1221
      %v1965 = vunpack.c.l.b16 %v1222
      %v1966 = vunpack.c.h.b16 %v1222
      %v1967 = vunpack.c.l.b16 %v1223
      %v1968 = vunpack.c.h.b16 %v1223
      %v1969 = vunpack.c.l.b16 %v1224
      %v1970 = vunpack.c.h.b16 %v1224
      %v1971 = vunpack.c.l.b16 %v1225
      %v1972 = vunpack.c.h.b16 %v1225
      %v1973 = vunpack.c.l.b16 %v1226
      %v1974 = vunpack.c.h.b16 %v1226
      %v1975 = vunpack.c.l.b16 %v1227
      %v1976 = vunpack.c.h.b16 %v1227
      %v1977 = vunpack.c.l.b16 %v1228
      %v1978 = vunpack.c.h.b16 %v1228
      %v1979 = vunpack.c.l.b16 %v1229
      %v1980 = vunpack.c.h.b16 %v1229
      %v1981 = vunpack.c.l.b16 %v1230
      %v1982 = vunpack.c.h.b16 %v1230
      %v1983 = vunpack.c.l.b16 %v1231
      %v1984 = vunpack.c.h.b16 %v1231
      %v1985 = vunpack.c.l.b16 %v1232
      %v1986 = vunpack.c.h.b16 %v1232
      %v1987 = vunpack.c.l.b16 %v1233
      %v1988 = vunpack.c.h.b16 %v1233
      %v1989 = vunpack.c.l.b16 %v1234
      %v1990 = vunpack.c.h.b16 %v1234
      %v1991 = vunpack.c.l.b16 %v1235
      %v1992 = vunpack.c.h.b16 %v1235
      %v1993 = vunpack.c.l.b16 %v1236
      %v1994 = vunpack.c.h.b16 %v1236
      %v1995 = vunpack.c.l.b16 %v1237
      %v1996 = vunpack.c.h.b16 %v1237
      %v1997 = vunpack.c.l.b16 %v1238
      %v1998 = vunpack.c.h.b16 %v1238
      %v1999 = vunpack.c.l.b16 %v1239
      %v2000 = vunpack.c.h.b16 %v1239
      %v2001 = vunpack.c.l.b16 %v1240
      %v2002 = vunpack.c.h.b16 %v1240
      %v2003 = vunpack.c.l.b16 %v1241
      %v2004 = vunpack.c.h.b16 %v1241
      %v2005 = vunpack.c.l.b16 %v1242
      %v2006 = vunpack.c.h.b16 %v1242
      %v2007 = vunpack.c.l.b16 %v1243
      %v2008 = vunpack.c.h.b16 %v1243
      %v2009 = vunpack.c.l.b16 %v1244
      %v2010 = vunpack.c.h.b16 %v1244
      %v2011 = vunpack.c.l.b16 %v1245
      %v2012 = vunpack.c.h.b16 %v1245
      %v2013 = vunpack.c.l.b16 %v1246
      %v2014 = vunpack.c.h.b16 %v1246
      %v2015 = vpack.c.b16 %v1511, %v1503
      %v2016 = vpack.c.b16 %v1512, %v1504
      %v2017 = vpack.c.b16 %v1513, %v1505
      %v2018 = vpack.c.b16 %v1514, %v1506
      %v2019 = vpack.c.b16 %v1515, %v1507
      %v2020 = vpack.c.b16 %v1516, %v1508
      %v2021 = vpack.c.b16 %v1517, %v1509
      %v2022 = vpack.c.b16 %v1518, %v1510
      %v2023 = vpack.c.b16 %v1527, %v1519
      %v2024 = vpack.c.b16 %v1528, %v1520
      %v2025 = vpack.c.b16 %v1529, %v1521
      %v2026 = vpack.c.b16 %v1530, %v1522
      %v2027 = vpack.c.b16 %v1531, %v1523
      %v2028 = vpack.c.b16 %v1532, %v1524
      %v2029 = vpack.c.b16 %v1533, %v1525
      %v2030 = vpack.c.b16 %v1534, %v1526
      %v2031 = vpack.c.b16 %v1543, %v1535
      %v2032 = vpack.c.b16 %v1544, %v1536
      %v2033 = vpack.c.b16 %v1545, %v1537
      %v2034 = vpack.c.b16 %v1546, %v1538
      %v2035 = vpack.c.b16 %v1547, %v1539
      %v2036 = vpack.c.b16 %v1548, %v1540
      %v2037 = vpack.c.b16 %v1549, %v1541
      %v2038 = vpack.c.b16 %v1550, %v1542
      %v2039 = vpack.c.b16 %v1559, %v1551
      %v2040 = vpack.c.b16 %v1560, %v1552
      %v2041 = vpack.c.b16 %v1561, %v1553
      %v2042 = vpack.c.b16 %v1562, %v1554
      %v2043 = vpack.c.b16 %v1563, %v1555
      %v2044 = vpack.c.b16 %v1564, %v1556
      %v2045 = vpack.c.b16 %v1565, %v1557
      %v2046 = vpack.c.b16 %v1566, %v1558
      %v2047 = vpack.c.b16 %v1575, %v1567
      %v2048 = vpack.c.b16 %v1576, %v1568
      %v2049 = vpack.c.b16 %v1577, %v1569
      %v2050 = vpack.c.b16 %v1578, %v1570
      %v2051 = vpack.c.b16 %v1579, %v1571
      %v2052 = vpack.c.b16 %v1580, %v1572
      %v2053 = vpack.c.b16 %v1581, %v1573
      %v2054 = vpack.c.b16 %v1582, %v1574
      %v2055 = vpack.c.b16 %v1591, %v1583
      %v2056 = vpack.c.b16 %v1592, %v1584
      %v2057 = vpack.c.b16 %v1593, %v1585
      %v2058 = vpack.c.b16 %v1594, %v1586
      %v2059 = vpack.c.b16 %v1595, %v1587
      %v2060 = vpack.c.b16 %v1596, %v1588
      %v2061 = vpack.c.b16 %v1597, %v1589
      %v2062 = vpack.c.b16 %v1598, %v1590
      %v2063 = vpack.c.b16 %v1607, %v1599
      %v2064 = vpack.c.b16 %v1608, %v1600
      %v2065 = vpack.c.b16 %v1609, %v1601
      %v2066 = vpack.c.b16 %v1610, %v1602
      %v2067 = vpack.c.b16 %v1611, %v1603
      %v2068 = vpack.c.b16 %v1612, %v1604
      %v2069 = vpack.c.b16 %v1613, %v1605
      %v2070 = vpack.c.b16 %v1614, %v1606
      %v2071 = vpack.c.b16 %v1623, %v1615
      %v2072 = vpack.c.b16 %v1624, %v1616
      %v2073 = vpack.c.b16 %v1625, %v1617
      %v2074 = vpack.c.b16 %v1626, %v1618
      %v2075 = vpack.c.b16 %v1627, %v1619
      %v2076 = vpack.c.b16 %v1628, %v1620
      %v2077 = vpack.c.b16 %v1629, %v1621
      %v2078 = vpack.c.b16 %v1630, %v1622
      %v2079 = vpack.c.b16 %v1639, %v1631
      %v2080 = vpack.c.b16 %v1640, %v1632
      %v2081 = vpack.c.b16 %v1641, %v1633
      %v2082 = vpack.c.b16 %v1642, %v1634
      %v2083 = vpack.c.b16 %v1643, %v1635
      %v2084 = vpack.c.b16 %v1644, %v1636
      %v2085 = vpack.c.b16 %v1645, %v1637
      %v2086 = vpack.c.b16 %v1646, %v1638
      %v2087 = vpack.c.b16 %v1655, %v1647
      %v2088 = vpack.c.b16 %v1656, %v1648
      %v2089 = vpack.c.b16 %v1657, %v1649
      %v2090 = vpack.c.b16 %v1658, %v1650
      %v2091 = vpack.c.b16 %v1659, %v1651
      %v2092 = vpack.c.b16 %v1660, %v1652
      %v2093 = vpack.c.b16 %v1661, %v1653
      %v2094 = vpack.c.b16 %v1662, %v1654
      %v2095 = vpack.c.b16 %v1671, %v1663
      %v2096 = vpack.c.b16 %v1672, %v1664
      %v2097 = vpack.c.b16 %v1673, %v1665
      %v2098 = vpack.c.b16 %v1674, %v1666
      %v2099 = vpack.c.b16 %v1675, %v1667
      %v2100 = vpack.c.b16 %v1676, %v1668
      %v2101 = vpack.c.b16 %v1677, %v1669
      %v2102 = vpack.c.b16 %v1678, %v1670
      %v2103 = vpack.c.b16 %v1687, %v1679
      %v2104 = vpack.c.b16 %v1688, %v1680
      %v2105 = vpack.c.b16 %v1689, %v1681
      %v2106 = vpack.c.b16 %v1690, %v1682
      %v2107 = vpack.c.b16 %v1691, %v1683
      %v2108 = vpack.c.b16 %v1692, %v1684
      %v2109 = vpack.c.b16 %v1693, %v1685
      %v2110 = vpack.c.b16 %v1694, %v1686
      %v2111 = vpack.c.b16 %v1703, %v1695
      %v2112 = vpack.c.b16 %v1704, %v1696
      %v2113 = vpack.c.b16 %v1705, %v1697
      %v2114 = vpack.c.b16 %v1706, %v1698
      %v2115 = vpack.c.b16 %v1707, %v1699
      %v2116 = vpack.c.b16 %v1708, %v1700
      %v2117 = vpack.c.b16 %v1709, %v1701
      %v2118 = vpack.c.b16 %v1710, %v1702
      %v2119 = vpack.c.b16 %v1719, %v1711
      %v2120 = vpack.c.b16 %v1720, %v1712
      %v2121 = vpack.c.b16 %v1721, %v1713
      %v2122 = vpack.c.b16 %v1722, %v1714
      %v2123 = vpack.c.b16 %v1723, %v1715
      %v2124 = vpack.c.b16 %v1724, %v1716
      %v2125 = vpack.c.b16 %v1725, %v1717
      %v2126 = vpack.c.b16 %v1726, %v1718
      %v2127 = vpack.c.b16 %v1735, %v1727
      %v2128 = vpack.c.b16 %v1736, %v1728
      %v2129 = vpack.c.b16 %v1737, %v1729
      %v2130 = vpack.c.b16 %v1738, %v1730
      %v2131 = vpack.c.b16 %v1739, %v1731
      %v2132 = vpack.c.b16 %v1740, %v1732
      %v2133 = vpack.c.b16 %v1741, %v1733
      %v2134 = vpack.c.b16 %v1742, %v1734
      %v2135 = vpack.c.b16 %v1751, %v1743
      %v2136 = vpack.c.b16 %v1752, %v1744
      %v2137 = vpack.c.b16 %v1753, %v1745
      %v2138 = vpack.c.b16 %v1754, %v1746
      %v2139 = vpack.c.b16 %v1755, %v1747
      %v2140 = vpack.c.b16 %v1756, %v1748
      %v2141 = vpack.c.b16 %v1757, %v1749
      %v2142 = vpack.c.b16 %v1758, %v1750
      %v2143 = vpack.c.b16 %v1767, %v1759
      %v2144 = vpack.c.b16 %v1768, %v1760
      %v2145 = vpack.c.b16 %v1769, %v1761
      %v2146 = vpack.c.b16 %v1770, %v1762
      %v2147 = vpack.c.b16 %v1771, %v1763
      %v2148 = vpack.c.b16 %v1772, %v1764
      %v2149 = vpack.c.b16 %v1773, %v1765
      %v2150 = vpack.c.b16 %v1774, %v1766
      %v2151 = vpack.c.b16 %v1783, %v1775
      %v2152 = vpack.c.b16 %v1784, %v1776
      %v2153 = vpack.c.b16 %v1785, %v1777
      %v2154 = vpack.c.b16 %v1786, %v1778
      %v2155 = vpack.c.b16 %v1787, %v1779
      %v2156 = vpack.c.b16 %v1788, %v1780
      %v2157 = vpack.c.b16 %v1789, %v1781
      %v2158 = vpack.c.b16 %v1790, %v1782
      %v2159 = vpack.c.b16 %v1799, %v1791
      %v2160 = vpack.c.b16 %v1800, %v1792
      %v2161 = vpack.c.b16 %v1801, %v1793
      %v2162 = vpack.c.b16 %v1802, %v1794
      %v2163 = vpack.c.b16 %v1803, %v1795
      %v2164 = vpack.c.b16 %v1804, %v1796
      %v2165 = vpack.c.b16 %v1805, %v1797
      %v2166 = vpack.c.b16 %v1806, %v1798
      %v2167 = vpack.c.b16 %v1815, %v1807
      %v2168 = vpack.c.b16 %v1816, %v1808
      %v2169 = vpack.c.b16 %v1817, %v1809
      %v2170 = vpack.c.b16 %v1818, %v1810
      %v2171 = vpack.c.b16 %v1819, %v1811
      %v2172 = vpack.c.b16 %v1820, %v1812
      %v2173 = vpack.c.b16 %v1821, %v1813
      %v2174 = vpack.c.b16 %v1822, %v1814
      %v2175 = vpack.c.b16 %v1831, %v1823
      %v2176 = vpack.c.b16 %v1832, %v1824
      %v2177 = vpack.c.b16 %v1833, %v1825
      %v2178 = vpack.c.b16 %v1834, %v1826
      %v2179 = vpack.c.b16 %v1835, %v1827
      %v2180 = vpack.c.b16 %v1836, %v1828
      %v2181 = vpack.c.b16 %v1837, %v1829
      %v2182 = vpack.c.b16 %v1838, %v1830
      %v2183 = vpack.c.b16 %v1847, %v1839
      %v2184 = vpack.c.b16 %v1848, %v1840
      %v2185 = vpack.c.b16 %v1849, %v1841
      %v2186 = vpack.c.b16 %v1850, %v1842
      %v2187 = vpack.c.b16 %v1851, %v1843
      %v2188 = vpack.c.b16 %v1852, %v1844
      %v2189 = vpack.c.b16 %v1853, %v1845
      %v2190 = vpack.c.b16 %v1854, %v1846
      %v2191 = vpack.c.b16 %v1863, %v1855
      %v2192 = vpack.c.b16 %v1864, %v1856
      %v2193 = vpack.c.b16 %v1865, %v1857
      %v2194 = vpack.c.b16 %v1866, %v1858
      %v2195 = vpack.c.b16 %v1867, %v1859
      %v2196 = vpack.c.b16 %v1868, %v1860
      %v2197 = vpack.c.b16 %v1869, %v1861
      %v2198 = vpack.c.b16 %v1870, %v1862
      %v2199 = vpack.c.b16 %v1879, %v1871
      %v2200 = vpack.c.b16 %v1880, %v1872
      %v2201 = vpack.c.b16 %v1881, %v1873
      %v2202 = vpack.c.b16 %v1882, %v1874
      %v2203 = vpack.c.b16 %v1883, %v1875
      %v2204 = vpack.c.b16 %v1884, %v1876
      %v2205 = vpack.c.b16 %v1885, %v1877
      %v2206 = vpack.c.b16 %v1886, %v1878
      %v2207 = vpack.c.b16 %v1895, %v1887
      %v2208 = vpack.c.b16 %v1896, %v1888
      %v2209 = vpack.c.b16 %v1897, %v1889
      %v2210 = vpack.c.b16 %v1898, %v1890
      %v2211 = vpack.c.b16 %v1899, %v1891
      %v2212 = vpack.c.b16 %v1900, %v1892
      %v2213 = vpack.c.b16 %v1901, %v1893
      %v2214 = vpack.c.b16 %v1902, %v1894
      %v2215 = vpack.c.b16 %v1911, %v1903
      %v2216 = vpack.c.b16 %v1912, %v1904
      %v2217 = vpack.c.b16 %v1913, %v1905
      %v2218 = vpack.c.b16 %v1914, %v1906
      %v2219 = vpack.c.b16 %v1915, %v1907
      %v2220 = vpack.c.b16 %v1916, %v1908
      %v2221 = vpack.c.b16 %v1917, %v1909
      %v2222 = vpack.c.b16 %v1918, %v1910
      %v2223 = vpack.c.b16 %v1927, %v1919
      %v2224 = vpack.c.b16 %v1928, %v1920
      %v2225 = vpack.c.b16 %v1929, %v1921
      %v2226 = vpack.c.b16 %v1930, %v1922
      %v2227 = vpack.c.b16 %v1931, %v1923
      %v2228 = vpack.c.b16 %v1932, %v1924
      %v2229 = vpack.c.b16 %v1933, %v1925
      %v2230 = vpack.c.b16 %v1934, %v1926
      %v2231 = vpack.c.b16 %v1943, %v1935
      %v2232 = vpack.c.b16 %v1944, %v1936
      %v2233 = vpack.c.b16 %v1945, %v1937
      %v2234 = vpack.c.b16 %v1946, %v1938
      %v2235 = vpack.c.b16 %v1947, %v1939
      %v2236 = vpack.c.b16 %v1948, %v1940
      %v2237 = vpack.c.b16 %v1949, %v1941
      %v2238 = vpack.c.b16 %v1950, %v1942
      %v2239 = vpack.c.b16 %v1959, %v1951
      %v2240 = vpack.c.b16 %v1960, %v1952
      %v2241 = vpack.c.b16 %v1961, %v1953
      %v2242 = vpack.c.b16 %v1962, %v1954
      %v2243 = vpack.c.b16 %v1963, %v1955
      %v2244 = vpack.c.b16 %v1964, %v1956
      %v2245 = vpack.c.b16 %v1965, %v1957
      %v2246 = vpack.c.b16 %v1966, %v1958
      %v2247 = vpack.c.b16 %v1975, %v1967
      %v2248 = vpack.c.b16 %v1976, %v1968
      %v2249 = vpack.c.b16 %v1977, %v1969
      %v2250 = vpack.c.b16 %v1978, %v1970
      %v2251 = vpack.c.b16 %v1979, %v1971
      %v2252 = vpack.c.b16 %v1980, %v1972
      %v2253 = vpack.c.b16 %v1981, %v1973
      %v2254 = vpack.c.b16 %v1982, %v1974
      %v2255 = vpack.c.b16 %v1991, %v1983
      %v2256 = vpack.c.b16 %v1992, %v1984
      %v2257 = vpack.c.b16 %v1993, %v1985
      %v2258 = vpack.c.b16 %v1994, %v1986
      %v2259 = vpack.c.b16 %v1995, %v1987
      %v2260 = vpack.c.b16 %v1996, %v1988
      %v2261 = vpack.c.b16 %v1997, %v1989
      %v2262 = vpack.c.b16 %v1998, %v1990
      %v2263 = vpack.c.b16 %v2007, %v1999
      %v2264 = vpack.c.b16 %v2008, %v2000
      %v2265 = vpack.c.b16 %v2009, %v2001
      %v2266 = vpack.c.b16 %v2010, %v2002
      %v2267 = vpack.c.b16 %v2011, %v2003
      %v2268 = vpack.c.b16 %v2012, %v2004
      %v2269 = vpack.c.b16 %v2013, %v2005
      %v2270 = vpack.c.b16 %v2014, %v2006
      %2527 = vmatprep.subr.bf16.mxu0 %v2072
      %2528 = vmatpush1.bf16.msra.mxu0 %v2071
      %2529 = vmatprep.subr.bf16.mxu0 %v2064
      %2530 = vmatpush1.bf16.msra.mxu0 %v2063
      %2531 = vmatprep.subr.bf16.mxu0 %v2056
      %2532 = vmatpush1.bf16.msra.mxu0 %v2055
      %2533 = vmatprep.subr.bf16.mxu0 %v2048
      %2534 = vmatpush1.bf16.msra.mxu0 %v2047
      %2535 = vmatprep.subr.bf16.mxu0 %v2040
      %2536 = vmatpush1.bf16.msra.mxu0 %v2039
      %2537 = vmatprep.subr.bf16.mxu0 %v2032
      %2538 = vmatpush1.bf16.msra.mxu0 %v2031
      %2539 = vmatprep.subr.bf16.mxu0 %v2024
      %2540 = vmatpush1.bf16.msra.mxu0 %v2023
      %2541 = vmatprep.subr.bf16.mxu0 %v2016
      %2542 = vmatpush1.bf16.msra.mxu0 %v2015
      %2543 = vmatprep.subr.bf16.mxu0 %v2136
      %2544 = vmatpush2.bf16.msra.mxu0 %v2135
      %2545 = vmatprep.subr.bf16.mxu0 %v2128
      %2546 = vmatpush2.bf16.msra.mxu0 %v2127
      %2547 = vmatprep.subr.bf16.mxu0 %v2120
      %2548 = vmatpush2.bf16.msra.mxu0 %v2119
      %2549 = vmatprep.subr.bf16.mxu0 %v2112
      %2550 = vmatpush2.bf16.msra.mxu0 %v2111
      %2551 = vmatprep.subr.bf16.mxu0 %v2104
      %2552 = vmatpush2.bf16.msra.mxu0 %v2103
      %2553 = vmatprep.subr.bf16.mxu0 %v2096
      %2554 = vmatpush2.bf16.msra.mxu0 %v2095
      %2555 = vmatprep.subr.bf16.mxu0 %v2088
      %2556 = vmatpush2.bf16.msra.mxu0 %v2087
      %2557 = vmatprep.subr.bf16.mxu0 %v2080
      %2558 = vmatpush2.bf16.msra.mxu0 %v2079
      %2559 = vmatprep.mubr.bf16.mxu0 %v976
      %2560 = vmatmul.mubr.bf16.gmra.mxu0 %v975
      %v2561 = vpop.f32.mrf.mxu0
      %v2562 = vadd.f32 0.0, %v2561
      %v2563 = vpop.f32.mrf.mxu0
      %v2564 = vadd.f32 0.0, %v2563
      %v2565 = vpop.f32.mrf.mxu0
      %v2566 = vadd.f32 0.0, %v2565
      %v2567 = vpop.f32.mrf.mxu0
      %v2568 = vadd.f32 0.0, %v2567
      %2569 = vmatprep.mubr.bf16.mxu0 %v980
      %2570 = vmatmul.mubr.bf16.gmra.mxu0 %v979
      %v2571 = vpop.f32.mrf.mxu0
      %v2572 = vadd.f32 0.0, %v2571
      %v2573 = vpop.f32.mrf.mxu0
      %v2574 = vadd.f32 0.0, %v2573
      %v2575 = vpop.f32.mrf.mxu0
      %v2576 = vadd.f32 0.0, %v2575
      %v2577 = vpop.f32.mrf.mxu0
      %v2578 = vadd.f32 0.0, %v2577
      %2579 = vmatprep.mubr.bf16.mxu0 %v984
      %2580 = vmatmul.mubr.bf16.gmra.mxu0 %v983
      %v2581 = vpop.f32.mrf.mxu0
      %v2582 = vadd.f32 0.0, %v2581
      %v2583 = vpop.f32.mrf.mxu0
      %v2584 = vadd.f32 0.0, %v2583
      %v2585 = vpop.f32.mrf.mxu0
      %v2586 = vadd.f32 0.0, %v2585
      %v2587 = vpop.f32.mrf.mxu0
      %v2588 = vadd.f32 0.0, %v2587
      %2589 = vmatprep.mubr.bf16.mxu0 %v988
      %2590 = vmatmul.mubr.bf16.gmra.mxu0 %v987
      %v2591 = vpop.f32.mrf.mxu0
      %v2592 = vadd.f32 0.0, %v2591
      %v2593 = vpop.f32.mrf.mxu0
      %v2594 = vadd.f32 0.0, %v2593
      %v2595 = vpop.f32.mrf.mxu0
      %v2596 = vadd.f32 0.0, %v2595
      %v2597 = vpop.f32.mrf.mxu0
      %v2598 = vadd.f32 0.0, %v2597
      %2599 = vdwg.mxu0
      %2600 = vmatprep.subr.bf16.mxu0 %v2200
      %2601 = vmatpush1.bf16.msra.mxu0 %v2199
      %2602 = vmatprep.subr.bf16.mxu0 %v2192
      %2603 = vmatpush1.bf16.msra.mxu0 %v2191
      %2604 = vmatprep.subr.bf16.mxu0 %v2184
      %2605 = vmatpush1.bf16.msra.mxu0 %v2183
      %2606 = vmatprep.subr.bf16.mxu0 %v2176
      %2607 = vmatpush1.bf16.msra.mxu0 %v2175
      %2608 = vmatprep.subr.bf16.mxu0 %v2168
      %2609 = vmatpush1.bf16.msra.mxu0 %v2167
      %2610 = vmatprep.subr.bf16.mxu0 %v2160
      %2611 = vmatpush1.bf16.msra.mxu0 %v2159
      %2612 = vmatprep.subr.bf16.mxu0 %v2152
      %2613 = vmatpush1.bf16.msra.mxu0 %v2151
      %2614 = vmatprep.subr.bf16.mxu0 %v2144
      %2615 = vmatpush1.bf16.msra.mxu0 %v2143
      %2616 = vmatprep.subr.bf16.mxu0 %v2264
      %2617 = vmatpush2.bf16.msra.mxu0 %v2263
      %2618 = vmatprep.subr.bf16.mxu0 %v2256
      %2619 = vmatpush2.bf16.msra.mxu0 %v2255
      %2620 = vmatprep.subr.bf16.mxu0 %v2248
      %2621 = vmatpush2.bf16.msra.mxu0 %v2247
      %2622 = vmatprep.subr.bf16.mxu0 %v2240
      %2623 = vmatpush2.bf16.msra.mxu0 %v2239
      %2624 = vmatprep.subr.bf16.mxu0 %v2232
      %2625 = vmatpush2.bf16.msra.mxu0 %v2231
      %2626 = vmatprep.subr.bf16.mxu0 %v2224
      %2627 = vmatpush2.bf16.msra.mxu0 %v2223
      %2628 = vmatprep.subr.bf16.mxu0 %v2216
      %2629 = vmatpush2.bf16.msra.mxu0 %v2215
      %2630 = vmatprep.subr.bf16.mxu0 %v2208
      %2631 = vmatpush2.bf16.msra.mxu0 %v2207
      %2632 = vmatprep.mubr.bf16.mxu0 %v978
      %2633 = vmatmul.mubr.bf16.gmra.mxu0 %v977
      %v2634 = vpop.f32.mrf.mxu0
      %v2635 = vadd.f32 %v2562, %v2634
      %v2636 = vpop.f32.mrf.mxu0
      %v2637 = vadd.f32 %v2564, %v2636
      %v2638 = vpop.f32.mrf.mxu0
      %v2639 = vadd.f32 %v2566, %v2638
      %v2640 = vpop.f32.mrf.mxu0
      %v2641 = vadd.f32 %v2568, %v2640
      %2642 = vmatprep.mubr.bf16.mxu0 %v982
      %2643 = vmatmul.mubr.bf16.gmra.mxu0 %v981
      %v2644 = vpop.f32.mrf.mxu0
      %v2645 = vadd.f32 %v2572, %v2644
      %v2646 = vpop.f32.mrf.mxu0
      %v2647 = vadd.f32 %v2574, %v2646
      %v2648 = vpop.f32.mrf.mxu0
      %v2649 = vadd.f32 %v2576, %v2648
      %v2650 = vpop.f32.mrf.mxu0
      %v2651 = vadd.f32 %v2578, %v2650
      %2652 = vmatprep.mubr.bf16.mxu0 %v986
      %2653 = vmatmul.mubr.bf16.gmra.mxu0 %v985
      %v2654 = vpop.f32.mrf.mxu0
      %v2655 = vadd.f32 %v2582, %v2654
      %v2656 = vpop.f32.mrf.mxu0
      %v2657 = vadd.f32 %v2584, %v2656
      %v2658 = vpop.f32.mrf.mxu0
      %v2659 = vadd.f32 %v2586, %v2658
      %v2660 = vpop.f32.mrf.mxu0
      %v2661 = vadd.f32 %v2588, %v2660
      %2662 = vmatprep.mubr.bf16.mxu0 %v990
      %2663 = vmatmul.mubr.bf16.gmra.mxu0 %v989
      %v2664 = vpop.f32.mrf.mxu0
      %v2665 = vadd.f32 %v2592, %v2664
      %v2666 = vpop.f32.mrf.mxu0
      %v2667 = vadd.f32 %v2594, %v2666
      %v2668 = vpop.f32.mrf.mxu0
      %v2669 = vadd.f32 %v2596, %v2668
      %v2670 = vpop.f32.mrf.mxu0
      %v2671 = vadd.f32 %v2598, %v2670
      %2672 = vdwg.mxu0
      %2673 = vmatprep.subr.bf16.mxu0 %v2074
      %2674 = vmatpush1.bf16.msra.mxu0 %v2073
      %2675 = vmatprep.subr.bf16.mxu0 %v2066
      %2676 = vmatpush1.bf16.msra.mxu0 %v2065
      %2677 = vmatprep.subr.bf16.mxu0 %v2058
      %2678 = vmatpush1.bf16.msra.mxu0 %v2057
      %2679 = vmatprep.subr.bf16.mxu0 %v2050
      %2680 = vmatpush1.bf16.msra.mxu0 %v2049
      %2681 = vmatprep.subr.bf16.mxu0 %v2042
      %2682 = vmatpush1.bf16.msra.mxu0 %v2041
      %2683 = vmatprep.subr.bf16.mxu0 %v2034
      %2684 = vmatpush1.bf16.msra.mxu0 %v2033
      %2685 = vmatprep.subr.bf16.mxu0 %v2026
      %2686 = vmatpush1.bf16.msra.mxu0 %v2025
      %2687 = vmatprep.subr.bf16.mxu0 %v2018
      %2688 = vmatpush1.bf16.msra.mxu0 %v2017
      %2689 = vmatprep.subr.bf16.mxu0 %v2138
      %2690 = vmatpush2.bf16.msra.mxu0 %v2137
      %2691 = vmatprep.subr.bf16.mxu0 %v2130
      %2692 = vmatpush2.bf16.msra.mxu0 %v2129
      %2693 = vmatprep.subr.bf16.mxu0 %v2122
      %2694 = vmatpush2.bf16.msra.mxu0 %v2121
      %2695 = vmatprep.subr.bf16.mxu0 %v2114
      %2696 = vmatpush2.bf16.msra.mxu0 %v2113
      %2697 = vmatprep.subr.bf16.mxu0 %v2106
      %2698 = vmatpush2.bf16.msra.mxu0 %v2105
      %2699 = vmatprep.subr.bf16.mxu0 %v2098
      %2700 = vmatpush2.bf16.msra.mxu0 %v2097
      %2701 = vmatprep.subr.bf16.mxu0 %v2090
      %2702 = vmatpush2.bf16.msra.mxu0 %v2089
      %2703 = vmatprep.subr.bf16.mxu0 %v2082
      %2704 = vmatpush2.bf16.msra.mxu0 %v2081
      %2705 = vmatprep.mubr.bf16.mxu0 %v976
      %2706 = vmatmul.mubr.bf16.gmra.mxu0 %v975
      %v2707 = vpop.f32.mrf.mxu0
      %v2708 = vadd.f32 0.0, %v2707
      %v2709 = vpop.f32.mrf.mxu0
      %v2710 = vadd.f32 0.0, %v2709
      %v2711 = vpop.f32.mrf.mxu0
      %v2712 = vadd.f32 0.0, %v2711
      %v2713 = vpop.f32.mrf.mxu0
      %v2714 = vadd.f32 0.0, %v2713
      %2715 = vmatprep.mubr.bf16.mxu0 %v980
      %2716 = vmatmul.mubr.bf16.gmra.mxu0 %v979
      %v2717 = vpop.f32.mrf.mxu0
      %v2718 = vadd.f32 0.0, %v2717
      %v2719 = vpop.f32.mrf.mxu0
      %v2720 = vadd.f32 0.0, %v2719
      %v2721 = vpop.f32.mrf.mxu0
      %v2722 = vadd.f32 0.0, %v2721
      %v2723 = vpop.f32.mrf.mxu0
      %v2724 = vadd.f32 0.0, %v2723
      %2725 = vmatprep.mubr.bf16.mxu0 %v984
      %2726 = vmatmul.mubr.bf16.gmra.mxu0 %v983
      %v2727 = vpop.f32.mrf.mxu0
      %v2728 = vadd.f32 0.0, %v2727
      %v2729 = vpop.f32.mrf.mxu0
      %v2730 = vadd.f32 0.0, %v2729
      %v2731 = vpop.f32.mrf.mxu0
      %v2732 = vadd.f32 0.0, %v2731
      %v2733 = vpop.f32.mrf.mxu0
      %v2734 = vadd.f32 0.0, %v2733
      %2735 = vmatprep.mubr.bf16.mxu0 %v988
      %2736 = vmatmul.mubr.bf16.gmra.mxu0 %v987
      %v2737 = vpop.f32.mrf.mxu0
      %v2738 = vadd.f32 0.0, %v2737
      %v2739 = vpop.f32.mrf.mxu0
      %v2740 = vadd.f32 0.0, %v2739
      %v2741 = vpop.f32.mrf.mxu0
      %v2742 = vadd.f32 0.0, %v2741
      %v2743 = vpop.f32.mrf.mxu0
      %v2744 = vadd.f32 0.0, %v2743
      %2745 = vdwg.mxu0
      %2746 = vmatprep.subr.bf16.mxu0 %v2202
      %2747 = vmatpush1.bf16.msra.mxu0 %v2201
      %2748 = vmatprep.subr.bf16.mxu0 %v2194
      %2749 = vmatpush1.bf16.msra.mxu0 %v2193
      %2750 = vmatprep.subr.bf16.mxu0 %v2186
      %2751 = vmatpush1.bf16.msra.mxu0 %v2185
      %2752 = vmatprep.subr.bf16.mxu0 %v2178
      %2753 = vmatpush1.bf16.msra.mxu0 %v2177
      %2754 = vmatprep.subr.bf16.mxu0 %v2170
      %2755 = vmatpush1.bf16.msra.mxu0 %v2169
      %2756 = vmatprep.subr.bf16.mxu0 %v2162
      %2757 = vmatpush1.bf16.msra.mxu0 %v2161
      %2758 = vmatprep.subr.bf16.mxu0 %v2154
      %2759 = vmatpush1.bf16.msra.mxu0 %v2153
      %2760 = vmatprep.subr.bf16.mxu0 %v2146
      %2761 = vmatpush1.bf16.msra.mxu0 %v2145
      %2762 = vmatprep.subr.bf16.mxu0 %v2266
      %2763 = vmatpush2.bf16.msra.mxu0 %v2265
      %2764 = vmatprep.subr.bf16.mxu0 %v2258
      %2765 = vmatpush2.bf16.msra.mxu0 %v2257
      %2766 = vmatprep.subr.bf16.mxu0 %v2250
      %2767 = vmatpush2.bf16.msra.mxu0 %v2249
      %2768 = vmatprep.subr.bf16.mxu0 %v2242
      %2769 = vmatpush2.bf16.msra.mxu0 %v2241
      %2770 = vmatprep.subr.bf16.mxu0 %v2234
      %2771 = vmatpush2.bf16.msra.mxu0 %v2233
      %2772 = vmatprep.subr.bf16.mxu0 %v2226
      %2773 = vmatpush2.bf16.msra.mxu0 %v2225
      %2774 = vmatprep.subr.bf16.mxu0 %v2218
      %2775 = vmatpush2.bf16.msra.mxu0 %v2217
      %2776 = vmatprep.subr.bf16.mxu0 %v2210
      %2777 = vmatpush2.bf16.msra.mxu0 %v2209
      %2778 = vmatprep.mubr.bf16.mxu0 %v978
      %2779 = vmatmul.mubr.bf16.gmra.mxu0 %v977
      %v2780 = vpop.f32.mrf.mxu0
      %v2781 = vadd.f32 %v2708, %v2780
      %v2782 = vpop.f32.mrf.mxu0
      %v2783 = vadd.f32 %v2710, %v2782
      %v2784 = vpop.f32.mrf.mxu0
      %v2785 = vadd.f32 %v2712, %v2784
      %v2786 = vpop.f32.mrf.mxu0
      %v2787 = vadd.f32 %v2714, %v2786
      %2788 = vmatprep.mubr.bf16.mxu0 %v982
      %2789 = vmatmul.mubr.bf16.gmra.mxu0 %v981
      %v2790 = vpop.f32.mrf.mxu0
      %v2791 = vadd.f32 %v2718, %v2790
      %v2792 = vpop.f32.mrf.mxu0
      %v2793 = vadd.f32 %v2720, %v2792
      %v2794 = vpop.f32.mrf.mxu0
      %v2795 = vadd.f32 %v2722, %v2794
      %v2796 = vpop.f32.mrf.mxu0
      %v2797 = vadd.f32 %v2724, %v2796
      %2798 = vmatprep.mubr.bf16.mxu0 %v986
      %2799 = vmatmul.mubr.bf16.gmra.mxu0 %v985
      %v2800 = vpop.f32.mrf.mxu0
      %v2801 = vadd.f32 %v2728, %v2800
      %v2802 = vpop.f32.mrf.mxu0
      %v2803 = vadd.f32 %v2730, %v2802
      %v2804 = vpop.f32.mrf.mxu0
      %v2805 = vadd.f32 %v2732, %v2804
      %v2806 = vpop.f32.mrf.mxu0
      %v2807 = vadd.f32 %v2734, %v2806
      %2808 = vmatprep.mubr.bf16.mxu0 %v990
      %2809 = vmatmul.mubr.bf16.gmra.mxu0 %v989
      %v2810 = vpop.f32.mrf.mxu0
      %v2811 = vadd.f32 %v2738, %v2810
      %v2812 = vpop.f32.mrf.mxu0
      %v2813 = vadd.f32 %v2740, %v2812
      %v2814 = vpop.f32.mrf.mxu0
      %v2815 = vadd.f32 %v2742, %v2814
      %v2816 = vpop.f32.mrf.mxu0
      %v2817 = vadd.f32 %v2744, %v2816
      %2818 = vdwg.mxu0
      %2819 = vmatprep.subr.bf16.mxu0 %v2076
      %2820 = vmatpush1.bf16.msra.mxu0 %v2075
      %2821 = vmatprep.subr.bf16.mxu0 %v2068
      %2822 = vmatpush1.bf16.msra.mxu0 %v2067
      %2823 = vmatprep.subr.bf16.mxu0 %v2060
      %2824 = vmatpush1.bf16.msra.mxu0 %v2059
      %2825 = vmatprep.subr.bf16.mxu0 %v2052
      %2826 = vmatpush1.bf16.msra.mxu0 %v2051
      %2827 = vmatprep.subr.bf16.mxu0 %v2044
      %2828 = vmatpush1.bf16.msra.mxu0 %v2043
      %2829 = vmatprep.subr.bf16.mxu0 %v2036
      %2830 = vmatpush1.bf16.msra.mxu0 %v2035
      %2831 = vmatprep.subr.bf16.mxu0 %v2028
      %2832 = vmatpush1.bf16.msra.mxu0 %v2027
      %2833 = vmatprep.subr.bf16.mxu0 %v2020
      %2834 = vmatpush1.bf16.msra.mxu0 %v2019
      %2835 = vmatprep.subr.bf16.mxu0 %v2140
      %2836 = vmatpush2.bf16.msra.mxu0 %v2139
      %2837 = vmatprep.subr.bf16.mxu0 %v2132
      %2838 = vmatpush2.bf16.msra.mxu0 %v2131
      %2839 = vmatprep.subr.bf16.mxu0 %v2124
      %2840 = vmatpush2.bf16.msra.mxu0 %v2123
      %2841 = vmatprep.subr.bf16.mxu0 %v2116
      %2842 = vmatpush2.bf16.msra.mxu0 %v2115
      %2843 = vmatprep.subr.bf16.mxu0 %v2108
      %2844 = vmatpush2.bf16.msra.mxu0 %v2107
      %2845 = vmatprep.subr.bf16.mxu0 %v2100
      %2846 = vmatpush2.bf16.msra.mxu0 %v2099
      %2847 = vmatprep.subr.bf16.mxu0 %v2092
      %2848 = vmatpush2.bf16.msra.mxu0 %v2091
      %2849 = vmatprep.subr.bf16.mxu0 %v2084
      %2850 = vmatpush2.bf16.msra.mxu0 %v2083
      %2851 = vmatprep.mubr.bf16.mxu0 %v976
      %2852 = vmatmul.mubr.bf16.gmra.mxu0 %v975
      %v2853 = vpop.f32.mrf.mxu0
      %v2854 = vadd.f32 0.0, %v2853
      %v2855 = vpop.f32.mrf.mxu0
      %v2856 = vadd.f32 0.0, %v2855
      %v2857 = vpop.f32.mrf.mxu0
      %v2858 = vadd.f32 0.0, %v2857
      %v2859 = vpop.f32.mrf.mxu0
      %v2860 = vadd.f32 0.0, %v2859
      %2861 = vmatprep.mubr.bf16.mxu0 %v980
      %2862 = vmatmul.mubr.bf16.gmra.mxu0 %v979
      %v2863 = vpop.f32.mrf.mxu0
      %v2864 = vadd.f32 0.0, %v2863
      %v2865 = vpop.f32.mrf.mxu0
      %v2866 = vadd.f32 0.0, %v2865
      %v2867 = vpop.f32.mrf.mxu0
      %v2868 = vadd.f32 0.0, %v2867
      %v2869 = vpop.f32.mrf.mxu0
      %v2870 = vadd.f32 0.0, %v2869
      %2871 = vmatprep.mubr.bf16.mxu0 %v984
      %2872 = vmatmul.mubr.bf16.gmra.mxu0 %v983
      %v2873 = vpop.f32.mrf.mxu0
      %v2874 = vadd.f32 0.0, %v2873
      %v2875 = vpop.f32.mrf.mxu0
      %v2876 = vadd.f32 0.0, %v2875
      %v2877 = vpop.f32.mrf.mxu0
      %v2878 = vadd.f32 0.0, %v2877
      %v2879 = vpop.f32.mrf.mxu0
      %v2880 = vadd.f32 0.0, %v2879
      %2881 = vmatprep.mubr.bf16.mxu0 %v988
      %2882 = vmatmul.mubr.bf16.gmra.mxu0 %v987
      %v2883 = vpop.f32.mrf.mxu0
      %v2884 = vadd.f32 0.0, %v2883
      %v2885 = vpop.f32.mrf.mxu0
      %v2886 = vadd.f32 0.0, %v2885
      %v2887 = vpop.f32.mrf.mxu0
      %v2888 = vadd.f32 0.0, %v2887
      %v2889 = vpop.f32.mrf.mxu0
      %v2890 = vadd.f32 0.0, %v2889
      %2891 = vdwg.mxu0
      %2892 = vmatprep.subr.bf16.mxu0 %v2204
      %2893 = vmatpush1.bf16.msra.mxu0 %v2203
      %2894 = vmatprep.subr.bf16.mxu0 %v2196
      %2895 = vmatpush1.bf16.msra.mxu0 %v2195
      %2896 = vmatprep.subr.bf16.mxu0 %v2188
      %2897 = vmatpush1.bf16.msra.mxu0 %v2187
      %2898 = vmatprep.subr.bf16.mxu0 %v2180
      %2899 = vmatpush1.bf16.msra.mxu0 %v2179
      %2900 = vmatprep.subr.bf16.mxu0 %v2172
      %2901 = vmatpush1.bf16.msra.mxu0 %v2171
      %2902 = vmatprep.subr.bf16.mxu0 %v2164
      %2903 = vmatpush1.bf16.msra.mxu0 %v2163
      %2904 = vmatprep.subr.bf16.mxu0 %v2156
      %2905 = vmatpush1.bf16.msra.mxu0 %v2155
      %2906 = vmatprep.subr.bf16.mxu0 %v2148
      %2907 = vmatpush1.bf16.msra.mxu0 %v2147
      %2908 = vmatprep.subr.bf16.mxu0 %v2268
      %2909 = vmatpush2.bf16.msra.mxu0 %v2267
      %2910 = vmatprep.subr.bf16.mxu0 %v2260
      %2911 = vmatpush2.bf16.msra.mxu0 %v2259
      %2912 = vmatprep.subr.bf16.mxu0 %v2252
      %2913 = vmatpush2.bf16.msra.mxu0 %v2251
      %2914 = vmatprep.subr.bf16.mxu0 %v2244
      %2915 = vmatpush2.bf16.msra.mxu0 %v2243
      %2916 = vmatprep.subr.bf16.mxu0 %v2236
      %2917 = vmatpush2.bf16.msra.mxu0 %v2235
      %2918 = vmatprep.subr.bf16.mxu0 %v2228
      %2919 = vmatpush2.bf16.msra.mxu0 %v2227
      %2920 = vmatprep.subr.bf16.mxu0 %v2220
      %2921 = vmatpush2.bf16.msra.mxu0 %v2219
      %2922 = vmatprep.subr.bf16.mxu0 %v2212
      %2923 = vmatpush2.bf16.msra.mxu0 %v2211
      %2924 = vmatprep.mubr.bf16.mxu0 %v978
      %2925 = vmatmul.mubr.bf16.gmra.mxu0 %v977
      %v2926 = vpop.f32.mrf.mxu0
      %v2927 = vadd.f32 %v2854, %v2926
      %v2928 = vpop.f32.mrf.mxu0
      %v2929 = vadd.f32 %v2856, %v2928
      %v2930 = vpop.f32.mrf.mxu0
      %v2931 = vadd.f32 %v2858, %v2930
      %v2932 = vpop.f32.mrf.mxu0
      %v2933 = vadd.f32 %v2860, %v2932
      %2934 = vmatprep.mubr.bf16.mxu0 %v982
      %2935 = vmatmul.mubr.bf16.gmra.mxu0 %v981
      %v2936 = vpop.f32.mrf.mxu0
      %v2937 = vadd.f32 %v2864, %v2936
      %v2938 = vpop.f32.mrf.mxu0
      %v2939 = vadd.f32 %v2866, %v2938
      %v2940 = vpop.f32.mrf.mxu0
      %v2941 = vadd.f32 %v2868, %v2940
      %v2942 = vpop.f32.mrf.mxu0
      %v2943 = vadd.f32 %v2870, %v2942
      %2944 = vmatprep.mubr.bf16.mxu0 %v986
      %2945 = vmatmul.mubr.bf16.gmra.mxu0 %v985
      %v2946 = vpop.f32.mrf.mxu0
      %v2947 = vadd.f32 %v2874, %v2946
      %v2948 = vpop.f32.mrf.mxu0
      %v2949 = vadd.f32 %v2876, %v2948
      %v2950 = vpop.f32.mrf.mxu0
      %v2951 = vadd.f32 %v2878, %v2950
      %v2952 = vpop.f32.mrf.mxu0
      %v2953 = vadd.f32 %v2880, %v2952
      %2954 = vmatprep.mubr.bf16.mxu0 %v990
      %2955 = vmatmul.mubr.bf16.gmra.mxu0 %v989
      %v2956 = vpop.f32.mrf.mxu0
      %v2957 = vadd.f32 %v2884, %v2956
      %v2958 = vpop.f32.mrf.mxu0
      %v2959 = vadd.f32 %v2886, %v2958
      %v2960 = vpop.f32.mrf.mxu0
      %v2961 = vadd.f32 %v2888, %v2960
      %v2962 = vpop.f32.mrf.mxu0
      %v2963 = vadd.f32 %v2890, %v2962
      %2964 = vdwg.mxu0
      %2965 = vmatprep.subr.bf16.mxu0 %v2078
      %2966 = vmatpush1.bf16.msra.mxu0 %v2077
      %2967 = vmatprep.subr.bf16.mxu0 %v2070
      %2968 = vmatpush1.bf16.msra.mxu0 %v2069
      %2969 = vmatprep.subr.bf16.mxu0 %v2062
      %2970 = vmatpush1.bf16.msra.mxu0 %v2061
      %2971 = vmatprep.subr.bf16.mxu0 %v2054
      %2972 = vmatpush1.bf16.msra.mxu0 %v2053
      %2973 = vmatprep.subr.bf16.mxu0 %v2046
      %2974 = vmatpush1.bf16.msra.mxu0 %v2045
      %2975 = vmatprep.subr.bf16.mxu0 %v2038
      %2976 = vmatpush1.bf16.msra.mxu0 %v2037
      %2977 = vmatprep.subr.bf16.mxu0 %v2030
      %2978 = vmatpush1.bf16.msra.mxu0 %v2029
      %2979 = vmatprep.subr.bf16.mxu0 %v2022
      %2980 = vmatpush1.bf16.msra.mxu0 %v2021
      %2981 = vmatprep.subr.bf16.mxu0 %v2142
      %2982 = vmatpush2.bf16.msra.mxu0 %v2141
      %2983 = vmatprep.subr.bf16.mxu0 %v2134
      %2984 = vmatpush2.bf16.msra.mxu0 %v2133
      %2985 = vmatprep.subr.bf16.mxu0 %v2126
      %2986 = vmatpush2.bf16.msra.mxu0 %v2125
      %2987 = vmatprep.subr.bf16.mxu0 %v2118
      %2988 = vmatpush2.bf16.msra.mxu0 %v2117
      %2989 = vmatprep.subr.bf16.mxu0 %v2110
      %2990 = vmatpush2.bf16.msra.mxu0 %v2109
      %2991 = vmatprep.subr.bf16.mxu0 %v2102
      %2992 = vmatpush2.bf16.msra.mxu0 %v2101
      %2993 = vmatprep.subr.bf16.mxu0 %v2094
      %2994 = vmatpush2.bf16.msra.mxu0 %v2093
      %2995 = vmatprep.subr.bf16.mxu0 %v2086
      %2996 = vmatpush2.bf16.msra.mxu0 %v2085
      %2997 = vmatprep.mubr.bf16.mxu0 %v976
      %2998 = vmatmul.mubr.bf16.gmra.mxu0 %v975
      %v2999 = vpop.f32.mrf.mxu0
      %v3000 = vadd.f32 0.0, %v2999
      %v3001 = vpop.f32.mrf.mxu0
      %v3002 = vadd.f32 0.0, %v3001
      %v3003 = vpop.f32.mrf.mxu0
      %v3004 = vadd.f32 0.0, %v3003
      %v3005 = vpop.f32.mrf.mxu0
      %v3006 = vadd.f32 0.0, %v3005
      %3007 = vmatprep.mubr.bf16.mxu0 %v980
      %3008 = vmatmul.mubr.bf16.gmra.mxu0 %v979
      %v3009 = vpop.f32.mrf.mxu0
      %v3010 = vadd.f32 0.0, %v3009
      %v3011 = vpop.f32.mrf.mxu0
      %v3012 = vadd.f32 0.0, %v3011
      %v3013 = vpop.f32.mrf.mxu0
      %v3014 = vadd.f32 0.0, %v3013
      %v3015 = vpop.f32.mrf.mxu0
      %v3016 = vadd.f32 0.0, %v3015
      %3017 = vmatprep.mubr.bf16.mxu0 %v984
      %3018 = vmatmul.mubr.bf16.gmra.mxu0 %v983
      %v3019 = vpop.f32.mrf.mxu0
      %v3020 = vadd.f32 0.0, %v3019
      %v3021 = vpop.f32.mrf.mxu0
      %v3022 = vadd.f32 0.0, %v3021
      %v3023 = vpop.f32.mrf.mxu0
      %v3024 = vadd.f32 0.0, %v3023
      %v3025 = vpop.f32.mrf.mxu0
      %v3026 = vadd.f32 0.0, %v3025
      %3027 = vmatprep.mubr.bf16.mxu0 %v988
      %3028 = vmatmul.mubr.bf16.gmra.mxu0 %v987
      %v3029 = vpop.f32.mrf.mxu0
      %v3030 = vadd.f32 0.0, %v3029
      %v3031 = vpop.f32.mrf.mxu0
      %v3032 = vadd.f32 0.0, %v3031
      %v3033 = vpop.f32.mrf.mxu0
      %v3034 = vadd.f32 0.0, %v3033
      %v3035 = vpop.f32.mrf.mxu0
      %v3036 = vadd.f32 0.0, %v3035
      %3037 = vdwg.mxu0
      %3038 = vmatprep.subr.bf16.mxu0 %v2206
      %3039 = vmatpush1.bf16.msra.mxu0 %v2205
      %3040 = vmatprep.subr.bf16.mxu0 %v2198
      %3041 = vmatpush1.bf16.msra.mxu0 %v2197
      %3042 = vmatprep.subr.bf16.mxu0 %v2190
      %3043 = vmatpush1.bf16.msra.mxu0 %v2189
      %3044 = vmatprep.subr.bf16.mxu0 %v2182
      %3045 = vmatpush1.bf16.msra.mxu0 %v2181
      %3046 = vmatprep.subr.bf16.mxu0 %v2174
      %3047 = vmatpush1.bf16.msra.mxu0 %v2173
      %3048 = vmatprep.subr.bf16.mxu0 %v2166
      %3049 = vmatpush1.bf16.msra.mxu0 %v2165
      %3050 = vmatprep.subr.bf16.mxu0 %v2158
      %3051 = vmatpush1.bf16.msra.mxu0 %v2157
      %3052 = vmatprep.subr.bf16.mxu0 %v2150
      %3053 = vmatpush1.bf16.msra.mxu0 %v2149
      %3054 = vmatprep.subr.bf16.mxu0 %v2270
      %3055 = vmatpush2.bf16.msra.mxu0 %v2269
      %3056 = vmatprep.subr.bf16.mxu0 %v2262
      %3057 = vmatpush2.bf16.msra.mxu0 %v2261
      %3058 = vmatprep.subr.bf16.mxu0 %v2254
      %3059 = vmatpush2.bf16.msra.mxu0 %v2253
      %3060 = vmatprep.subr.bf16.mxu0 %v2246
      %3061 = vmatpush2.bf16.msra.mxu0 %v2245
      %3062 = vmatprep.subr.bf16.mxu0 %v2238
      %3063 = vmatpush2.bf16.msra.mxu0 %v2237
      %3064 = vmatprep.subr.bf16.mxu0 %v2230
      %3065 = vmatpush2.bf16.msra.mxu0 %v2229
      %3066 = vmatprep.subr.bf16.mxu0 %v2222
      %3067 = vmatpush2.bf16.msra.mxu0 %v2221
      %3068 = vmatprep.subr.bf16.mxu0 %v2214
      %3069 = vmatpush2.bf16.msra.mxu0 %v2213
      %3070 = vmatprep.mubr.bf16.mxu0 %v978
      %3071 = vmatmul.mubr.bf16.gmra.mxu0 %v977
      %v3072 = vpop.f32.mrf.mxu0
      %v3073 = vadd.f32 %v3000, %v3072
      %v3074 = vpop.f32.mrf.mxu0
      %v3075 = vadd.f32 %v3002, %v3074
      %v3076 = vpop.f32.mrf.mxu0
      %v3077 = vadd.f32 %v3004, %v3076
      %v3078 = vpop.f32.mrf.mxu0
      %v3079 = vadd.f32 %v3006, %v3078
      %3080 = vmatprep.mubr.bf16.mxu0 %v982
      %3081 = vmatmul.mubr.bf16.gmra.mxu0 %v981
      %v3082 = vpop.f32.mrf.mxu0
      %v3083 = vadd.f32 %v3010, %v3082
      %v3084 = vpop.f32.mrf.mxu0
      %v3085 = vadd.f32 %v3012, %v3084
      %v3086 = vpop.f32.mrf.mxu0
      %v3087 = vadd.f32 %v3014, %v3086
      %v3088 = vpop.f32.mrf.mxu0
      %v3089 = vadd.f32 %v3016, %v3088
      %3090 = vmatprep.mubr.bf16.mxu0 %v986
      %3091 = vmatmul.mubr.bf16.gmra.mxu0 %v985
      %v3092 = vpop.f32.mrf.mxu0
      %v3093 = vadd.f32 %v3020, %v3092
      %v3094 = vpop.f32.mrf.mxu0
      %v3095 = vadd.f32 %v3022, %v3094
      %v3096 = vpop.f32.mrf.mxu0
      %v3097 = vadd.f32 %v3024, %v3096
      %v3098 = vpop.f32.mrf.mxu0
      %v3099 = vadd.f32 %v3026, %v3098
      %3100 = vmatprep.mubr.bf16.mxu0 %v990
      %3101 = vmatmul.mubr.bf16.gmra.mxu0 %v989
      %v3102 = vpop.f32.mrf.mxu0
      %v3103 = vadd.f32 %v3030, %v3102
      %v3104 = vpop.f32.mrf.mxu0
      %v3105 = vadd.f32 %v3032, %v3104
      %v3106 = vpop.f32.mrf.mxu0
      %v3107 = vadd.f32 %v3034, %v3106
      %v3108 = vpop.f32.mrf.mxu0
      %v3109 = vadd.f32 %v3036, %v3108
      %3110 = vdwg.mxu0
      %v3111 = vmax.f32 %v2635, %v2639
      %v3112 = vmax.f32 %v3111, %v2645
      %v3113 = vmax.f32 %v3112, %v2649
      %v3114 = vmax.f32 %v3113, %v2655
      %v3115 = vmax.f32 %v3114, %v2659
      %v3116 = vmax.f32 %v3115, %v2665
      %v3117 = vmax.f32 %v3116, %v2669
      %v3118 = vrot.slane %v3117, 4
      %v3119 = vmax.f32 %v3117, %v3118
      %v3120 = vrot.slane %v3119, 2
      %v3121 = vmax.f32 %v3119, %v3120
      %v3122 = vrot.slane %v3121, 1
      %v3123 = vmax.f32 %v3121, %v3122
      %v3124 = vmax.f32 %v2637, %v2641
      %v3125 = vmax.f32 %v3124, %v2647
      %v3126 = vmax.f32 %v3125, %v2651
      %v3127 = vmax.f32 %v3126, %v2657
      %v3128 = vmax.f32 %v3127, %v2661
      %v3129 = vmax.f32 %v3128, %v2667
      %v3130 = vmax.f32 %v3129, %v2671
      %v3131 = vrot.slane %v3130, 4
      %v3132 = vmax.f32 %v3130, %v3131
      %v3133 = vrot.slane %v3132, 2
      %v3134 = vmax.f32 %v3132, %v3133
      %v3135 = vrot.slane %v3134, 1
      %v3136 = vmax.f32 %v3134, %v3135
      %v3137 = vmax.f32 %v2781, %v2785
      %v3138 = vmax.f32 %v3137, %v2791
      %v3139 = vmax.f32 %v3138, %v2795
      %v3140 = vmax.f32 %v3139, %v2801
      %v3141 = vmax.f32 %v3140, %v2805
      %v3142 = vmax.f32 %v3141, %v2811
      %v3143 = vmax.f32 %v3142, %v2815
      %v3144 = vrot.slane %v3143, 4
      %v3145 = vmax.f32 %v3143, %v3144
      %v3146 = vrot.slane %v3145, 2
      %v3147 = vmax.f32 %v3145, %v3146
      %v3148 = vrot.slane %v3147, 1
      %v3149 = vmax.f32 %v3147, %v3148
      %v3150 = vmax.f32 %v2783, %v2787
      %v3151 = vmax.f32 %v3150, %v2793
      %v3152 = vmax.f32 %v3151, %v2797
      %v3153 = vmax.f32 %v3152, %v2803
      %v3154 = vmax.f32 %v3153, %v2807
      %v3155 = vmax.f32 %v3154, %v2813
      %v3156 = vmax.f32 %v3155, %v2817
      %v3157 = vrot.slane %v3156, 4
      %v3158 = vmax.f32 %v3156, %v3157
      %v3159 = vrot.slane %v3158, 2
      %v3160 = vmax.f32 %v3158, %v3159
      %v3161 = vrot.slane %v3160, 1
      %v3162 = vmax.f32 %v3160, %v3161
      %v3163 = vmax.f32 %v2927, %v2931
      %v3164 = vmax.f32 %v3163, %v2937
      %v3165 = vmax.f32 %v3164, %v2941
      %v3166 = vmax.f32 %v3165, %v2947
      %v3167 = vmax.f32 %v3166, %v2951
      %v3168 = vmax.f32 %v3167, %v2957
      %v3169 = vmax.f32 %v3168, %v2961
      %v3170 = vrot.slane %v3169, 4
      %v3171 = vmax.f32 %v3169, %v3170
      %v3172 = vrot.slane %v3171, 2
      %v3173 = vmax.f32 %v3171, %v3172
      %v3174 = vrot.slane %v3173, 1
      %v3175 = vmax.f32 %v3173, %v3174
      %v3176 = vmax.f32 %v2929, %v2933
      %v3177 = vmax.f32 %v3176, %v2939
      %v3178 = vmax.f32 %v3177, %v2943
      %v3179 = vmax.f32 %v3178, %v2949
      %v3180 = vmax.f32 %v3179, %v2953
      %v3181 = vmax.f32 %v3180, %v2959
      %v3182 = vmax.f32 %v3181, %v2963
      %v3183 = vrot.slane %v3182, 4
      %v3184 = vmax.f32 %v3182, %v3183
      %v3185 = vrot.slane %v3184, 2
      %v3186 = vmax.f32 %v3184, %v3185
      %v3187 = vrot.slane %v3186, 1
      %v3188 = vmax.f32 %v3186, %v3187
      %v3189 = vmax.f32 %v3073, %v3077
      %v3190 = vmax.f32 %v3189, %v3083
      %v3191 = vmax.f32 %v3190, %v3087
      %v3192 = vmax.f32 %v3191, %v3093
      %v3193 = vmax.f32 %v3192, %v3097
      %v3194 = vmax.f32 %v3193, %v3103
      %v3195 = vmax.f32 %v3194, %v3107
      %v3196 = vrot.slane %v3195, 4
      %v3197 = vmax.f32 %v3195, %v3196
      %v3198 = vrot.slane %v3197, 2
      %v3199 = vmax.f32 %v3197, %v3198
      %v3200 = vrot.slane %v3199, 1
      %v3201 = vmax.f32 %v3199, %v3200
      %v3202 = vmax.f32 %v3075, %v3079
      %v3203 = vmax.f32 %v3202, %v3085
      %v3204 = vmax.f32 %v3203, %v3089
      %v3205 = vmax.f32 %v3204, %v3095
      %v3206 = vmax.f32 %v3205, %v3099
      %v3207 = vmax.f32 %v3206, %v3105
      %v3208 = vmax.f32 %v3207, %v3109
      %v3209 = vrot.slane %v3208, 4
      %v3210 = vmax.f32 %v3208, %v3209
      %v3211 = vrot.slane %v3210, 2
      %v3212 = vmax.f32 %v3210, %v3211
      %v3213 = vrot.slane %v3212, 1
      %v3214 = vmax.f32 %v3212, %v3213
      %p3215 = scmp.eq.s32.totalorder %s21, 0
      // Predicated region
      $region41: #{_finger_feature_impl.1} parent=39 // pred_check
        %p3216 = pneg %p3215
      $region42: #{_finger_feature_impl.1} parent=39 // pred_check_branch
        %3218 = sbr.rel (%p3216) target = $region44
      $region43: #{_finger_feature_impl.1} parent=39 // pred_region
        %v3227 = vcombine.low %v3123, %v3136
        %v3228 = vcombine.low %v3149, %v3162
        %v3229 = vcombine.low %v3175, %v3188
        %v3230 = vcombine.low %v3201, %v3214
        %v3232 = vunpack.c.l.s4 1966171168
        %v3233 = vunpack.c.0.s8 %v3232
        %v3234 = vlaneseq
        %v3235 = vshrl.u32 %v3234, 7
        %v3236 = vsub.s32 %v3233, %v3235
        %v3237 = vrot.slane %v3227, %v3236
        %v3239 = vunpack.c.l.s4 1966171168
        %v3240 = vunpack.c.0.s8 %v3239
        %v3241 = vlaneseq
        %v3242 = vshrl.u32 %v3241, 7
        %v3243 = vsub.s32 %v3240, %v3242
        %v3244 = vrot.slane %v3228, %v3243
        %v3246 = vunpack.c.l.s4 1966171168
        %v3247 = vunpack.c.0.s8 %v3246
        %v3248 = vlaneseq
        %v3249 = vshrl.u32 %v3248, 7
        %v3250 = vsub.s32 %v3247, %v3249
        %v3251 = vrot.slane %v3229, %v3250
        %v3253 = vunpack.c.l.s4 1966171168
        %v3254 = vunpack.c.0.s8 %v3253
        %v3255 = vlaneseq
        %v3256 = vshrl.u32 %v3255, 7
        %v3257 = vsub.s32 %v3254, %v3256
        %v3258 = vrot.slane %v3230, %v3257
        %v3259 = vcombine.low %v3237, %v3244
        %v3260 = vcombine.low %v3251, %v3258
        %v3262 = vunpack.c.l.s4 1966171168
        %v3263 = vunpack.c.0.s8 %v3262
        %v3264 = vlaneseq
        %v3265 = vshrl.u32 %v3264, 7
        %v3266 = vsub.s32 %v3263, %v3265
        %v3267 = vrot.slane %v3259, %v3266
        %v3269 = vunpack.c.l.s4 1966171168
        %v3270 = vunpack.c.0.s8 %v3269
        %v3271 = vlaneseq
        %v3272 = vshrl.u32 %v3271, 7
        %v3273 = vsub.s32 %v3270, %v3272
        %v3274 = vrot.slane %v3260, %v3273
        %v3275 = vcombine.low %v3267, %v3274
        %3277 = vst [vmem:[%s250] sm:$0xff] %v3275
      $region44: #{_finger_feature_impl.1} parent=39 // pred_fallthru
        _
      %p3278 = scmp.gt.s32.totalorder %s21, 0
      // Predicated region
      $region45: #{_finger_feature_impl.1} parent=39 // pred_check
        %p3279 = pneg %p3278
      $region46: #{_finger_feature_impl.1} parent=39 // pred_check_branch
        %3281 = sbr.rel (%p3279) target = $region48
      $region47: #{_finger_feature_impl.1} parent=39 // pred_region
        %v3282 = vld [vmem:[%s250] sm:$0xff]
        %v3291 = vcombine.low %v3123, %v3136
        %v3292 = vcombine.low %v3149, %v3162
        %v3293 = vcombine.low %v3175, %v3188
        %v3294 = vcombine.low %v3201, %v3214
        %v3296 = vunpack.c.l.s4 1966171168
        %v3297 = vunpack.c.0.s8 %v3296
        %v3298 = vlaneseq
        %v3299 = vshrl.u32 %v3298, 7
        %v3300 = vsub.s32 %v3297, %v3299
        %v3301 = vrot.slane %v3291, %v3300
        %v3303 = vunpack.c.l.s4 1966171168
        %v3304 = vunpack.c.0.s8 %v3303
        %v3305 = vlaneseq
        %v3306 = vshrl.u32 %v3305, 7
        %v3307 = vsub.s32 %v3304, %v3306
        %v3308 = vrot.slane %v3292, %v3307
        %v3310 = vunpack.c.l.s4 1966171168
        %v3311 = vunpack.c.0.s8 %v3310
        %v3312 = vlaneseq
        %v3313 = vshrl.u32 %v3312, 7
        %v3314 = vsub.s32 %v3311, %v3313
        %v3315 = vrot.slane %v3293, %v3314
        %v3317 = vunpack.c.l.s4 1966171168
        %v3318 = vunpack.c.0.s8 %v3317
        %v3319 = vlaneseq
        %v3320 = vshrl.u32 %v3319, 7
        %v3321 = vsub.s32 %v3318, %v3320
        %v3322 = vrot.slane %v3294, %v3321
        %v3323 = vcombine.low %v3301, %v3308
        %v3324 = vcombine.low %v3315, %v3322
        %v3326 = vunpack.c.l.s4 1966171168
        %v3327 = vunpack.c.0.s8 %v3326
        %v3328 = vlaneseq
        %v3329 = vshrl.u32 %v3328, 7
        %v3330 = vsub.s32 %v3327, %v3329
        %v3331 = vrot.slane %v3323, %v3330
        %v3333 = vunpack.c.l.s4 1966171168
        %v3334 = vunpack.c.0.s8 %v3333
        %v3335 = vlaneseq
        %v3336 = vshrl.u32 %v3335, 7
        %v3337 = vsub.s32 %v3334, %v3336
        %v3338 = vrot.slane %v3324, %v3337
        %v3339 = vcombine.low %v3331, %v3338
        %v3341 = vmax.f32 %v3282, %v3339
        %3342 = vst [vmem:[%s250] sm:$0xff] %v3341
      $region48: #{_finger_feature_impl.1} parent=39 // pred_fallthru
        _
      %p3343 = scmp.lt.s32.totalorder %s20, 1
      %s3344 = scalar_select %p3343, %s20, 1
      %s3345 = smul.addr %s3344, 8
      %s3346 = scalar_lea.vmem %s5, %s3345
      // Predicated region
      $region49: #{_finger_feature_impl.1} parent=39 // pred_check
        %p3347 = pneg %p158
      $region50: #{_finger_feature_impl.1} parent=39 // pred_check_branch
        %3349 = sbr.rel (%p3347) target = $region52
      $region51: #{_finger_feature_impl.1} parent=39 // pred_region
        _
      $region52: #{_finger_feature_impl.1} parent=39 // pred_fallthru
        _
    $region40: #{_finger_feature_impl.1} parent=5 // pred_fallthru
      _
    %p3350 = scmp.le.s32.totalorder 2, %s11
    // Predicated region
    $region53: #{_finger_feature_impl.1} parent=5 // pred_check
      %p3351 = pneg %p3350
    $region54: #{_finger_feature_impl.1} parent=5 // pred_check_branch
      %3353 = sbr.rel (%p3351) target = $region56
    $region55: #{_finger_feature_impl.1} parent=5 // pred_region
      %s3354 = ssub.s32 %s11, 2
      // Predicated region
      $region57: #{_finger_feature_impl.1} parent=55 // pred_check
        %p3355 = pneg %p164
      $region58: #{_finger_feature_impl.1} parent=55 // pred_check_branch
        %3357 = sbr.rel (%p3355) target = $region60
      $region59: #{_finger_feature_impl.1} parent=55 // pred_region
        %p3358 = scmp.lt.s32.totalorder %s22, 1
        %s3359 = scalar_select %p3358, %s22, 1
        %s3360 = smul.addr %s3359, 8
        %s3361 = scalar_lea.vmem %s5, %s3360
      $region60: #{_finger_feature_impl.1} parent=55 // pred_fallthru
        _
    $region56: #{_finger_feature_impl.1} parent=5 // pred_fallthru
      _
  $region6: #{_finger_feature_impl.1} parent=0 // loop_footer
    %s15 = sadd.s32 1, %s11
  $region7: #{_finger_feature_impl.1} parent=0 // loop_footer_branch
    %10 = sbr.rel target = $region3
  $region8: #{_finger_feature_impl.1} parent=0 // loop_exit
    _

</llo_original>
